<compile_context>
chip_gen: v7x
topology: tpu7x:2x2x1
jax: 0.10.0
libtpu: 0.0.40
codegen_flags: <defaults>
</compile_context>

<pallas_src>
import functools

import jax
import jax.numpy as jnp
from jax.experimental import pallas as pl
from jax.experimental.pallas import tpu as pltpu

# ----------------------------- config ---------------------------------------
B = 2            # batch
CIN = 4          # input channels
H = W = 16       # input spatial
P = 4            # patch / downsample factor ("backbone" stride)
HF, WF = H // P, W // P            # backbone feature-map spatial (4, 4)
HFWF = HF * WF                     # 16
CFEAT = 32       # backbone feature channels
NCLASS = 8       # head output channels (num classes)
HW = H * W                         # 256
PATCH_D = CIN * P * P              # 64


# --------------------------- Pallas kernel -----------------------------------
def fused_kernel(x_ref, w1_ref, b1_ref, w2a_ref, w2b_ref, b2_ref, o_ref, hr_ref,
                 *, apply_softmax: bool):
    """Fused backbone + head + bilinear upsample (+ optional channel softmax).

    x:   (HFWF*Bt, PATCH_D)        bf16, rows ordered (patch f major, batch b minor)
    w1:  (PATCH_D, CFEAT)          bf16 patchify-conv weights
    b1:  (1, CFEAT)                f32
    w2a: (HFWF*CFEAT, NCLASS*HFWF) bf16 1x1 head into (k-major, f-minor) lanes
    w2b: (NCLASS*HFWF, NCLASS*HW)  bf16 per-class block-diagonal kron(Uh, Uw)
    b2:  (1, NCLASS*HW)            f32 (bias after upsample == before, rows of U sum to 1)
    o:   (Bt, NCLASS*HW)           f32, lane-dense (2048 lanes)
    hr:  (Bt, HFWF*CFEAT)          bf16 VMEM scratch for the h relayout
    """
    bt = o_ref.shape[0]

    # ---- stage 1: patch embedding, M = HFWF*bt rows on the MXU --------------
    h = jnp.dot(x_ref[...], w1_ref[...], preferred_element_type=jnp.float32)
    h = jnp.maximum(h + b1_ref[...], 0.0)                 # bias + ReLU in f32
    hb = h.astype(jnp.bfloat16)

    # relayout (HFWF*bt, CFEAT) rows-(f,b) -> (bt, HFWF*CFEAT) lanes-(f,c)
    for f in range(HFWF):                                  # static unroll
        hr_ref[:, f * CFEAT:(f + 1) * CFEAT] = hb[f * bt:(f + 1) * bt, :]

    # ---- stage 2a: 1x1-conv head into (k-major, f-minor) lanes --------------
    y1 = jnp.dot(hr_ref[...], w2a_ref[...], preferred_element_type=jnp.float32)

    # ---- stage 2b: per-class bilinear upsample + bias ------------------------
    y = jnp.dot(y1.astype(jnp.bfloat16), w2b_ref[...],
                preferred_element_type=jnp.float32) + b2_ref[...]
    # y: (bt, NCLASS*HW), class k occupies lanes [k*HW, (k+1)*HW) (256-aligned).

    if not apply_softmax:
        o_ref[...] = y                                     # full-width store
    else:
        # Channel softmax on 256-lane-aligned slices; unnormalized exp is staged
        # in o_ref to cap vreg live ranges, then rescaled in place.
        m = y[:, :HW]
        for k in range(1, NCLASS):
            m = jnp.maximum(m, y[:, k * HW:(k + 1) * HW])
        denom = jnp.zeros_like(m)
        for k in range(NCLASS):
            e = jnp.exp(y[:, k * HW:(k + 1) * HW] - m)
            o_ref[:, k * HW:(k + 1) * HW] = e
            denom = denom + e
        inv = pl.reciprocal(denom, approx=True)            # EUP vrcp (free slot)
        for k in range(NCLASS):
            o_ref[:, k * HW:(k + 1) * HW] = o_ref[:, k * HW:(k + 1) * HW] * inv


def _fused_forward(x_patch, params, *, bt: int, apply_softmax: bool):
    flops = 2 * (HFWF * bt * PATCH_D * CFEAT
                 + bt * (HFWF * CFEAT) * (NCLASS * HFWF)
                 + bt * (NCLASS * HFWF) * (NCLASS * HW))
    bytes_accessed = (x_patch.size * 2
                      + params["w1"].size * 2
                      + params["w2a"].size * 2
                      + params["w2b"].size * 2
                      + params["b1"].size * 4
                      + params["b2big"].size * 4
                      + bt * NCLASS * HW * 4)
    kernel = functools.partial(fused_kernel, apply_softmax=apply_softmax)
    return pl.pallas_call(
        kernel,
        out_shape=jax.ShapeDtypeStruct((bt, NCLASS * HW), jnp.float32),
        in_specs=[pl.BlockSpec(memory_space=pltpu.MemorySpace.VMEM)] * 6,
        out_specs=pl.BlockSpec(memory_space=pltpu.MemorySpace.VMEM),
        scratch_shapes=[pltpu.VMEM((bt, HFWF * CFEAT), jnp.bfloat16)],
        compiler_params=pltpu.CompilerParams(vmem_limit_bytes=8 << 20),
        cost_estimate=pl.CostEstimate(
            flops=flops,
            transcendentals=(bt * NCLASS * HW) if apply_softmax else 0,
            bytes_accessed=bytes_accessed),
    )(x_patch, params["w1"], params["b1"], params["w2a"], params["w2b"],
      params["b2big"])


# --------------------------- wrappers ----------------------------------------
def _patchify(x):
    """(bt, CIN, H, W) -> (HFWF*bt, CIN*P*P) bf16, rows (f-major, b-minor)."""
    bt = x.shape[0]
    xp = x.reshape(bt, CIN, HF, P, WF, P).transpose(2, 4, 0, 1, 3, 5)
    return xp.reshape(HFWF * bt, PATCH_D).astype(jnp.bfloat16)


def _tta_perms():
    """Forward / inverse flat-pixel permutations for the 6 TTA variants."""
    yy, xx = jnp.meshgrid(jnp.arange(H), jnp.arange(W), indexing="ij")
    f = lambda y, x: (y * W + x).reshape(-1).astype(jnp.int32)
    p0 = f(yy, xx)                       # identity
    p1 = f(H - 1 - yy, xx)               # flip(2)
    p2 = f(yy, W - 1 - xx)               # flip(3)
    p3 = f(W - 1 - xx, yy)               # transpose(2,3).flip(3)   (H == W)
    p4 = f(xx, W - 1 - yy)               # flip(3).transpose(2,3)   (H == W)
    p5 = f(H - 1 - yy, W - 1 - xx)       # flip(2).flip(3)
    perm = jnp.stack([p0, p1, p2, p3, p4, p5])
    inv_perm = jnp.stack([p0, p1, p2, p4, p3, p5])   # p3/p4 invert each other
    return perm, inv_perm


@functools.partial(jax.jit, static_argnames=("tta",))
def forward(x, params, tta=False):
    """x: (B, CIN, H, W) NCHW  ->  (B, NCLASS, H, W) NCHW."""
    b = x.shape[0]
    if not tta:
        out = _fused_forward(_patchify(x), params, bt=b, apply_softmax=False)
        return out.reshape(b, NCLASS, H, W)

    # All 6 TTA variants built with one gather, run through ONE fused pallas_call
    # (softmax fused in-kernel); un-flips + sum done with one gather + reduce.
    perm, inv_perm = _tta_perms()
    x_flat = x.reshape(b, CIN, HW)
    variants = jnp.take(x_flat, perm, axis=2)               # (b, CIN, 6, HW)
    variants = variants.transpose(2, 0, 1, 3).reshape(6 * b, CIN, H, W)
    probs = _fused_forward(_patchify(variants), params, bt=6 * b,
                           apply_softmax=True)               # (6b, NCLASS*HW)
    probs = probs.reshape(6, b, NCLASS, HW)
    idx = jnp.broadcast_to(inv_perm[:, None, None, :], probs.shape)
    un = jnp.take_along_axis(probs, idx, axis=3)             # undo each transform
    out = un.sum(axis=0) / 6.0
    return out.reshape(b, NCLASS, H, W)


def _bilinear_matrix(out_size: int, in_size: int) -> jnp.ndarray:
    """Row-interpolation matrix matching PyTorch bilinear, align_corners=False."""
    scale = in_size / out_size
    dst = jnp.arange(out_size, dtype=jnp.float32)
    src = jnp.maximum((dst + 0.5) * scale - 0.5, 0.0)
    i0 = jnp.minimum(jnp.floor(src).astype(jnp.int32), in_size - 1)
    i1 = jnp.minimum(i0 + 1, in_size - 1)
    w1 = src - i0.astype(jnp.float32)
    w0 = 1.0 - w1
    u = jnp.zeros((out_size, in_size), jnp.float32)
    rows = jnp.arange(out_size)
    u = u.at[rows, i0].add(w0)
    u = u.at[rows, i1].add(w1)
    return u


def init_params():
    k1, k2, k3, k4 = jax.random.split(jax.random.PRNGKey(1), 4)
    # Weights are *stored* in bf16 for the kernel; round them through bf16 here so
    # the f32 reference uses the exact same effective parameters.
    q = lambda a: a.astype(jnp.bfloat16).astype(jnp.float32)
    w1 = q(jax.random.normal(k1, (PATCH_D, CFEAT), jnp.float32) * (1.0 / PATCH_D) ** 0.5)
    b1 = jax.random.normal(k2, (CFEAT,), jnp.float32) * 0.01
    w2 = q(jax.random.normal(k3, (CFEAT, NCLASS), jnp.float32) * (1.0 / CFEAT) ** 0.5)
    b2 = jax.random.normal(k4, (NCLASS,), jnp.float32) * 0.01

    uh = q(_bilinear_matrix(H, HF))                     # (H,  HF)
    uw = q(_bilinear_matrix(W, WF))                     # (W,  WF)
    U = jnp.kron(uh, uw)                                # (HW, HFWF), rows sum to 1

    # W2a[(f*CFEAT+c), (k*HFWF+f')] = w2[c,k] * delta(f,f')   -- 1x1 head
    w2a = jnp.einsum("ck,fg->fckg", w2, jnp.eye(HFWF, dtype=jnp.float32))
    w2a = w2a.reshape(HFWF * CFEAT, NCLASS * HFWF)
    # W2b[(k*HFWF+f), (k'*HW+s)] = delta(k,k') * U[s,f]       -- upsample
    w2b = jnp.einsum("kK,sf->kfKs", jnp.eye(NCLASS, dtype=jnp.float32), U)
    w2b = w2b.reshape(NCLASS * HFWF, NCLASS * HW)
    b2big = jnp.broadcast_to(b2[:, None], (NCLASS, HW)).reshape(1, NCLASS * HW)

    params = {
        "w1": w1.astype(jnp.bfloat16),
        "b1": b1.reshape(1, CFEAT),
        "w2a": w2a.astype(jnp.bfloat16),
        "w2b": w2b.astype(jnp.bfloat16),
        "b2big": b2big,
    }
    raw = {"w1": w1, "b1": b1, "w2": w2, "b2": b2, "uh": uh, "uw": uw}
    return params, raw


# --------------------------- pure-JAX reference -------------------------------
def _ref_base(x, raw):
    b = x.shape[0]
    xp = (
        x.reshape(b, CIN, HF, P, WF, P)
        .transpose(0, 2, 4, 1, 3, 5)
        .reshape(b * HF * WF, CIN * P * P)
        .astype(jnp.float32)
    )
    h = jnp.maximum(xp @ raw["w1"] + raw["b1"][None, :], 0.0)
    logits = h @ raw["w2"] + raw["b2"][None, :]
    feat = logits.reshape(b, HF, WF, NCLASS).transpose(0, 3, 1, 2)   # (b,K,HF,WF)
    return jnp.einsum("yh,bkhw,xw->bkyx", raw["uh"], feat, raw["uw"])


def _ref_forward(x, raw, tta=False):
    if not tta:
        return _ref_base(x, raw)
    sm = lambda z: jax.nn.softmax(z, axis=1)
    out = sm(_ref_base(x, raw))
    out = out + jnp.flip(sm(_ref_base(jnp.flip(x, 2), raw)), 2)
    out = out + jnp.flip(sm(_ref_base(jnp.flip(x, 3), raw)), 3)
    out = out + jnp.swapaxes(
        jnp.flip(sm(_ref_base(jnp.flip(jnp.swapaxes(x, 2, 3), 3), raw)), 3), 2, 3)
    out = out + jnp.flip(
        jnp.swapaxes(sm(_ref_base(jnp.swapaxes(jnp.flip(x, 3), 2, 3), raw)), 2, 3), 3)
    out = out + jnp.flip(
        jnp.flip(sm(_ref_base(jnp.flip(jnp.flip(x, 2), 3), raw)), 3), 2)
    return out / 6.0


if __name__ == "__main__":
    params, raw = init_params()
    x = jax.random.normal(jax.random.PRNGKey(0), (B, CIN, H, W), jnp.float32)

    out = jax.block_until_ready(forward(x, params, tta=False))
    assert out.shape == (B, NCLASS, H, W), out.shape
    ref = _ref_forward(x, raw, tta=False)
    err = float(jnp.max(jnp.abs(out - ref)))
    # bf16 MXU operands (x, h, y1 casts) vs. pure-f32 reference -> ~1e-2 max error.
    assert err < 2e-2, err

    out_tta = jax.block_until_ready(forward(x, params, tta=True))
    assert out_tta.shape == (B, NCLASS, H, W), out_tta.shape
    ref_tta = _ref_forward(x, raw, tta=True)
    err_tta = float(jnp.max(jnp.abs(out_tta - ref_tta)))
    # probabilities: bf16 + approx reciprocal -> few e-3 max error.
    assert err_tta < 1e-2, err_tta

    print("KERNEL_OK")
</pallas_src>

<mosaic_0001>
module attributes {stable_mosaic.version = 11 : i64} {
  func.func @fused_kernel(%arg0: memref<32x64xbf16, #tpu.memory_space<vmem>>, %arg1: memref<64x32xbf16, #tpu.memory_space<vmem>>, %arg2: memref<1x32xf32, #tpu.memory_space<vmem>>, %arg3: memref<512x128xbf16, #tpu.memory_space<vmem>>, %arg4: memref<128x2048xbf16, #tpu.memory_space<vmem>>, %arg5: memref<1x2048xf32, #tpu.memory_space<vmem>>, %arg6: memref<2x2048xf32, #tpu.memory_space<vmem>>, %arg7: memref<2x512xbf16, #tpu.memory_space<vmem>>) attributes {dimension_semantics = [], scalar_prefetch = 0 : i64, scratch_operands = 1 : i64, tpu.core_type = #tpu.core_type<tc>} {
    %c0 = arith.constant 0 : index
    %c0_0 = arith.constant 0 : index
    %0 = vector.load %arg0[%c0, %c0_0] : memref<32x64xbf16, #tpu.memory_space<vmem>>, vector<32x64xbf16>
    %c0_1 = arith.constant 0 : index
    %c0_2 = arith.constant 0 : index
    %1 = vector.load %arg1[%c0_1, %c0_2] : memref<64x32xbf16, #tpu.memory_space<vmem>>, vector<64x32xbf16>
    %cst = arith.constant dense<0.000000e+00> : vector<32x32xf32>
    %2 = tpu.matmul %0, %1, %cst {dimension_numbers = #tpu.dot_dimension_numbers<[1], [0], [0], [1], [0, 0, 1, 1], [], []>} : vector<32x64xbf16>, vector<64x32xbf16>, vector<32x32xf32> -> vector<32x32xf32>
    %c0_3 = arith.constant 0 : index
    %c0_4 = arith.constant 0 : index
    %3 = vector.load %arg2[%c0_3, %c0_4] : memref<1x32xf32, #tpu.memory_space<vmem>>, vector<1x32xf32>
    %4 = vector.broadcast %3 : vector<1x32xf32> to vector<32x32xf32>
    %5 = arith.addf %2, %4 : vector<32x32xf32>
    %cst_5 = arith.constant 0.000000e+00 : f32
    %6 = vector.broadcast %cst_5 : f32 to vector<32x32xf32>
    %7 = arith.maximumf %5, %6 : vector<32x32xf32>
    %8 = arith.truncf %7 : vector<32x32xf32> to vector<32x32xbf16>
    %9 = vector.extract_strided_slice %8 {offsets = [0, 0], sizes = [2, 32], strides = [1, 1]} : vector<32x32xbf16> to vector<2x32xbf16>
    %c0_6 = arith.constant 0 : index
    %c0_7 = arith.constant 0 : index
    %10 = vector.load %arg7[%c0_6, %c0_7] : memref<2x512xbf16, #tpu.memory_space<vmem>>, vector<2x32xbf16>
    tpu.vector_store %arg7[%c0_6, %c0_7], %9 {strides = array<i32>} : memref<2x512xbf16, #tpu.memory_space<vmem>>, vector<2x32xbf16>,
    %11 = vector.extract_strided_slice %8 {offsets = [2, 0], sizes = [2, 32], strides = [1, 1]} : vector<32x32xbf16> to vector<2x32xbf16>
    %c0_8 = arith.constant 0 : index
    %c32 = arith.constant 32 : index
    %12 = vector.load %arg7[%c0_8, %c32] : memref<2x512xbf16, #tpu.memory_space<vmem>>, vector<2x32xbf16>
    tpu.vector_store %arg7[%c0_8, %c32], %11 {strides = array<i32>} : memref<2x512xbf16, #tpu.memory_space<vmem>>, vector<2x32xbf16>,
    %13 = vector.extract_strided_slice %8 {offsets = [4, 0], sizes = [2, 32], strides = [1, 1]} : vector<32x32xbf16> to vector<2x32xbf16>
    %c0_9 = arith.constant 0 : index
    %c64 = arith.constant 64 : index
    %14 = vector.load %arg7[%c0_9, %c64] : memref<2x512xbf16, #tpu.memory_space<vmem>>, vector<2x32xbf16>
    tpu.vector_store %arg7[%c0_9, %c64], %13 {strides = array<i32>} : memref<2x512xbf16, #tpu.memory_space<vmem>>, vector<2x32xbf16>,
    %15 = vector.extract_strided_slice %8 {offsets = [6, 0], sizes = [2, 32], strides = [1, 1]} : vector<32x32xbf16> to vector<2x32xbf16>
    %c0_10 = arith.constant 0 : index
    %c96 = arith.constant 96 : index
    %16 = vector.load %arg7[%c0_10, %c96] : memref<2x512xbf16, #tpu.memory_space<vmem>>, vector<2x32xbf16>
    tpu.vector_store %arg7[%c0_10, %c96], %15 {strides = array<i32>} : memref<2x512xbf16, #tpu.memory_space<vmem>>, vector<2x32xbf16>,
    %17 = vector.extract_strided_slice %8 {offsets = [8, 0], sizes = [2, 32], strides = [1, 1]} : vector<32x32xbf16> to vector<2x32xbf16>
    %c0_11 = arith.constant 0 : index
    %c128 = arith.constant 128 : index
    %18 = vector.load %arg7[%c0_11, %c128] : memref<2x512xbf16, #tpu.memory_space<vmem>>, vector<2x32xbf16>
    tpu.vector_store %arg7[%c0_11, %c128], %17 {strides = array<i32>} : memref<2x512xbf16, #tpu.memory_space<vmem>>, vector<2x32xbf16>,
    %19 = vector.extract_strided_slice %8 {offsets = [10, 0], sizes = [2, 32], strides = [1, 1]} : vector<32x32xbf16> to vector<2x32xbf16>
    %c0_12 = arith.constant 0 : index
    %c160 = arith.constant 160 : index
    %20 = vector.load %arg7[%c0_12, %c160] : memref<2x512xbf16, #tpu.memory_space<vmem>>, vector<2x32xbf16>
    tpu.vector_store %arg7[%c0_12, %c160], %19 {strides = array<i32>} : memref<2x512xbf16, #tpu.memory_space<vmem>>, vector<2x32xbf16>,
    %21 = vector.extract_strided_slice %8 {offsets = [12, 0], sizes = [2, 32], strides = [1, 1]} : vector<32x32xbf16> to vector<2x32xbf16>
    %c0_13 = arith.constant 0 : index
    %c192 = arith.constant 192 : index
    %22 = vector.load %arg7[%c0_13, %c192] : memref<2x512xbf16, #tpu.memory_space<vmem>>, vector<2x32xbf16>
    tpu.vector_store %arg7[%c0_13, %c192], %21 {strides = array<i32>} : memref<2x512xbf16, #tpu.memory_space<vmem>>, vector<2x32xbf16>,
    %23 = vector.extract_strided_slice %8 {offsets = [14, 0], sizes = [2, 32], strides = [1, 1]} : vector<32x32xbf16> to vector<2x32xbf16>
    %c0_14 = arith.constant 0 : index
    %c224 = arith.constant 224 : index
    %24 = vector.load %arg7[%c0_14, %c224] : memref<2x512xbf16, #tpu.memory_space<vmem>>, vector<2x32xbf16>
    tpu.vector_store %arg7[%c0_14, %c224], %23 {strides = array<i32>} : memref<2x512xbf16, #tpu.memory_space<vmem>>, vector<2x32xbf16>,
    %25 = vector.extract_strided_slice %8 {offsets = [16, 0], sizes = [2, 32], strides = [1, 1]} : vector<32x32xbf16> to vector<2x32xbf16>
    %c0_15 = arith.constant 0 : index
    %c256 = arith.constant 256 : index
    %26 = vector.load %arg7[%c0_15, %c256] : memref<2x512xbf16, #tpu.memory_space<vmem>>, vector<2x32xbf16>
    tpu.vector_store %arg7[%c0_15, %c256], %25 {strides = array<i32>} : memref<2x512xbf16, #tpu.memory_space<vmem>>, vector<2x32xbf16>,
    %27 = vector.extract_strided_slice %8 {offsets = [18, 0], sizes = [2, 32], strides = [1, 1]} : vector<32x32xbf16> to vector<2x32xbf16>
    %c0_16 = arith.constant 0 : index
    %c288 = arith.constant 288 : index
    %28 = vector.load %arg7[%c0_16, %c288] : memref<2x512xbf16, #tpu.memory_space<vmem>>, vector<2x32xbf16>
    tpu.vector_store %arg7[%c0_16, %c288], %27 {strides = array<i32>} : memref<2x512xbf16, #tpu.memory_space<vmem>>, vector<2x32xbf16>,
    %29 = vector.extract_strided_slice %8 {offsets = [20, 0], sizes = [2, 32], strides = [1, 1]} : vector<32x32xbf16> to vector<2x32xbf16>
    %c0_17 = arith.constant 0 : index
    %c320 = arith.constant 320 : index
    %30 = vector.load %arg7[%c0_17, %c320] : memref<2x512xbf16, #tpu.memory_space<vmem>>, vector<2x32xbf16>
    tpu.vector_store %arg7[%c0_17, %c320], %29 {strides = array<i32>} : memref<2x512xbf16, #tpu.memory_space<vmem>>, vector<2x32xbf16>,
    %31 = vector.extract_strided_slice %8 {offsets = [22, 0], sizes = [2, 32], strides = [1, 1]} : vector<32x32xbf16> to vector<2x32xbf16>
    %c0_18 = arith.constant 0 : index
    %c352 = arith.constant 352 : index
    %32 = vector.load %arg7[%c0_18, %c352] : memref<2x512xbf16, #tpu.memory_space<vmem>>, vector<2x32xbf16>
    tpu.vector_store %arg7[%c0_18, %c352], %31 {strides = array<i32>} : memref<2x512xbf16, #tpu.memory_space<vmem>>, vector<2x32xbf16>,
    %33 = vector.extract_strided_slice %8 {offsets = [24, 0], sizes = [2, 32], strides = [1, 1]} : vector<32x32xbf16> to vector<2x32xbf16>
    %c0_19 = arith.constant 0 : index
    %c384 = arith.constant 384 : index
    %34 = vector.load %arg7[%c0_19, %c384] : memref<2x512xbf16, #tpu.memory_space<vmem>>, vector<2x32xbf16>
    tpu.vector_store %arg7[%c0_19, %c384], %33 {strides = array<i32>} : memref<2x512xbf16, #tpu.memory_space<vmem>>, vector<2x32xbf16>,
    %35 = vector.extract_strided_slice %8 {offsets = [26, 0], sizes = [2, 32], strides = [1, 1]} : vector<32x32xbf16> to vector<2x32xbf16>
    %c0_20 = arith.constant 0 : index
    %c416 = arith.constant 416 : index
    %36 = vector.load %arg7[%c0_20, %c416] : memref<2x512xbf16, #tpu.memory_space<vmem>>, vector<2x32xbf16>
    tpu.vector_store %arg7[%c0_20, %c416], %35 {strides = array<i32>} : memref<2x512xbf16, #tpu.memory_space<vmem>>, vector<2x32xbf16>,
    %37 = vector.extract_strided_slice %8 {offsets = [28, 0], sizes = [2, 32], strides = [1, 1]} : vector<32x32xbf16> to vector<2x32xbf16>
    %c0_21 = arith.constant 0 : index
    %c448 = arith.constant 448 : index
    %38 = vector.load %arg7[%c0_21, %c448] : memref<2x512xbf16, #tpu.memory_space<vmem>>, vector<2x32xbf16>
    tpu.vector_store %arg7[%c0_21, %c448], %37 {strides = array<i32>} : memref<2x512xbf16, #tpu.memory_space<vmem>>, vector<2x32xbf16>,
    %39 = vector.extract_strided_slice %8 {offsets = [30, 0], sizes = [2, 32], strides = [1, 1]} : vector<32x32xbf16> to vector<2x32xbf16>
    %c0_22 = arith.constant 0 : index
    %c480 = arith.constant 480 : index
    %40 = vector.load %arg7[%c0_22, %c480] : memref<2x512xbf16, #tpu.memory_space<vmem>>, vector<2x32xbf16>
    tpu.vector_store %arg7[%c0_22, %c480], %39 {strides = array<i32>} : memref<2x512xbf16, #tpu.memory_space<vmem>>, vector<2x32xbf16>,
    %c0_23 = arith.constant 0 : index
    %c0_24 = arith.constant 0 : index
    %41 = vector.load %arg7[%c0_23, %c0_24] : memref<2x512xbf16, #tpu.memory_space<vmem>>, vector<2x512xbf16>
    %c0_25 = arith.constant 0 : index
    %c0_26 = arith.constant 0 : index
    %42 = vector.load %arg3[%c0_25, %c0_26] : memref<512x128xbf16, #tpu.memory_space<vmem>>, vector<512x128xbf16>
    %cst_27 = arith.constant dense<0.000000e+00> : vector<2x128xf32>
    %43 = tpu.matmul %41, %42, %cst_27 {dimension_numbers = #tpu.dot_dimension_numbers<[1], [0], [0], [1], [0, 0, 1, 1], [], []>} : vector<2x512xbf16>, vector<512x128xbf16>, vector<2x128xf32> -> vector<2x128xf32>
    %44 = arith.truncf %43 : vector<2x128xf32> to vector<2x128xbf16>
    %c0_28 = arith.constant 0 : index
    %c0_29 = arith.constant 0 : index
    %45 = vector.load %arg4[%c0_28, %c0_29] : memref<128x2048xbf16, #tpu.memory_space<vmem>>, vector<128x2048xbf16>
    %cst_30 = arith.constant dense<0.000000e+00> : vector<2x2048xf32>
    %46 = tpu.matmul %44, %45, %cst_30 {dimension_numbers = #tpu.dot_dimension_numbers<[1], [0], [0], [1], [0, 0, 1, 1], [], []>} : vector<2x128xbf16>, vector<128x2048xbf16>, vector<2x2048xf32> -> vector<2x2048xf32>
    %c0_31 = arith.constant 0 : index
    %c0_32 = arith.constant 0 : index
    %47 = vector.load %arg5[%c0_31, %c0_32] : memref<1x2048xf32, #tpu.memory_space<vmem>>, vector<1x2048xf32>
    %48 = vector.broadcast %47 : vector<1x2048xf32> to vector<2x2048xf32>
    %49 = arith.addf %46, %48 : vector<2x2048xf32>
    %c0_33 = arith.constant 0 : index
    %c0_34 = arith.constant 0 : index
    %50 = vector.load %arg6[%c0_33, %c0_34] : memref<2x2048xf32, #tpu.memory_space<vmem>>, vector<2x2048xf32>
    tpu.vector_store %arg6[%c0_33, %c0_34], %49 {strides = array<i32>} : memref<2x2048xf32, #tpu.memory_space<vmem>>, vector<2x2048xf32>,
    return
  }
}

</mosaic_0001>

<llo_original>
// kernel: forward.1
$region0: #{forward.1}
  #allocation0 [shape = 'u32[]', space=smem, size = 0x4, offset = 0x4, fixed_abs, tag = 'smem constant byte address 0x4 - core index']
  #allocation1 [shape = 'u32[144,128]{1,0:T(1,128)}', space=vmem, size = 0x12000, scoped, tag = 'internal scratch']
  #allocation2 [shape = 'bf16[2,512]{1,0:T(2,128)(2,1)}', space=vmem, size = 0x800, scoped, tag = 'scratch operand']
  %s0 = inlined_call_operand.vmem [shape: bf16[32,64], index: 0, kind: input, shape index: {}]
  %s1 = inlined_call_operand.vmem [shape: bf16[64,32], index: 1, kind: input, shape index: {}]
  %s2 = inlined_call_operand.vmem [shape: f32[1,32], index: 2, kind: input, shape index: {}]
  %s3 = inlined_call_operand.vmem [shape: bf16[512,128], index: 3, kind: input, shape index: {}]
  %s4 = inlined_call_operand.vmem [shape: bf16[128,2048], index: 4, kind: input, shape index: {}]
  %s5 = inlined_call_operand.vmem [shape: f32[1,2048], index: 5, kind: input, shape index: {}]
  %s6 = inlined_call_operand.vmem [shape: f32[2,2048], index: 6, kind: output, shape index: {}]
  %s7 = sld [smem:[#allocation0]]
  $region34: #{forward.1} parent=0
    _
  %s9 = ssub.s32 1, %s7
  %s10 = scalar_select 0, %s9, %s7
  // Predicated region
  $region2: #{forward.1} parent=0 // pred_check
    _
  $region3: #{forward.1} parent=0 // pred_check_branch
    %12 = sbr.rel (0) target = $region5
  $region4: #{forward.1} parent=0 // pred_region
    _
  $region5: #{forward.1} parent=0 // pred_fallthru
    _
  // Predicated region
  $region6: #{forward.1} parent=0 // pred_check
    _
  $region7: #{forward.1} parent=0 // pred_check_branch
    %14 = sbr.rel (0) target = $region9
  $region8: #{forward.1} parent=0 // pred_region
    _
  $region9: #{forward.1} parent=0 // pred_fallthru
    _
  // Predicated region
  $region10: #{forward.1} parent=0 // pred_check
    _
  $region11: #{forward.1} parent=0 // pred_check_branch
    %16 = sbr.rel (0) target = $region13
  $region12: #{forward.1} parent=0 // pred_region
    _
  $region13: #{forward.1} parent=0 // pred_fallthru
    _
  // Predicated region
  $region14: #{forward.1} parent=0 // pred_check
    _
  $region15: #{forward.1} parent=0 // pred_check_branch
    %18 = sbr.rel (0) target = $region17
  $region16: #{forward.1} parent=0 // pred_region
    _
  $region17: #{forward.1} parent=0 // pred_fallthru
    _
  // Predicated region
  $region18: #{forward.1} parent=0 // pred_check
    _
  $region19: #{forward.1} parent=0 // pred_check_branch
    %20 = sbr.rel (0) target = $region21
  $region20: #{forward.1} parent=0 // pred_region
    _
  $region21: #{forward.1} parent=0 // pred_fallthru
    _
  // Predicated region
  $region22: #{forward.1} parent=0 // pred_check
    _
  $region23: #{forward.1} parent=0 // pred_check_branch
    %22 = sbr.rel (0) target = $region25
  $region24: #{forward.1} parent=0 // pred_region
    _
  $region25: #{forward.1} parent=0 // pred_fallthru
    _
  %v24 = vld [vmem:[%s0] sm:$0xf]
  %v25 = vld [vmem:[%s0 + $0x4] sm:$0xf]
  %v26 = vld [vmem:[%s0 + $0x8] sm:$0xf]
  %v27 = vld [vmem:[%s0 + $0xc] sm:$0xf]
  %v28 = vld [vmem:[%s1] sm:$0xf]
  %v29 = vld [vmem:[%s1 + $0x4] sm:$0xf]
  %v30 = vld [vmem:[%s1 + $0x8] sm:$0xf]
  %v31 = vld [vmem:[%s1 + $0xc] sm:$0xf]
  %v32 = vld [vmem:[%s1 + $0x10] sm:$0xf]
  %v33 = vld [vmem:[%s1 + $0x14] sm:$0xf]
  %v34 = vld [vmem:[%s1 + $0x18] sm:$0xf]
  %v35 = vld [vmem:[%s1 + $0x1c] sm:$0xf]
  %v36 = vld [vmem:[%s2] sm:$0x1]
  %v38 = vlaneseq
  %v39 = vshrl.u32 %v38, 7
  %v40 = vsub.s32 0, %v39
  %v41 = vrot.slane %v36, %v40
  %v47 = vunpack.c.l.b16 %v24
  %v48 = vunpack.c.l.b16 %v25
  %v49 = vunpack.c.l.b16 %v26
  %v50 = vunpack.c.l.b16 %v27
  %v51 = vpack.c.b16 %v48, %v47
  %v52 = vpack.c.b16 %v50, %v49
  %v61 = vunpack.c.l.b16 %v28
  %v62 = vunpack.c.l.b16 %v29
  %v63 = vunpack.c.l.b16 %v30
  %v64 = vunpack.c.l.b16 %v31
  %v65 = vunpack.c.l.b16 %v32
  %v66 = vunpack.c.l.b16 %v33
  %v67 = vunpack.c.l.b16 %v34
  %v68 = vunpack.c.l.b16 %v35
  %v69 = vpack.c.b16 %v62, %v61
  %v70 = vpack.c.b16 %v64, %v63
  %v71 = vpack.c.b16 %v66, %v65
  %v72 = vpack.c.b16 %v68, %v67
  %vm77 = vcmask 523264
  %v79 = vsel %vm77, %v51, 0
  %v82 = vsel %vm77, %v52, 0
  %84 = vmatprep.subr.bf16.mxu0 0
  %85 = vmatpush1.bf16.msra.mxu0 %v69
  %86 = vmatprep.subr.bf16.mxu0 0
  %87 = vmatpush1.bf16.msra.mxu0 %v70
  %88 = vmatprep.subr.bf16.mxu0 0
  %89 = vmatpush1.bf16.msra.mxu0 %v71
  %90 = vmatprep.subr.bf16.mxu0 0
  %91 = vmatpush1.bf16.msra.mxu0 %v72
  %92 = vmatprep.subr.bf16.mxu0 0
  %93 = vmatpush1.bf16.msra.mxu0 0
  %94 = vmatprep.subr.bf16.mxu0 0
  %95 = vmatpush1.bf16.msra.mxu0 0
  %96 = vmatprep.subr.bf16.mxu0 0
  %97 = vmatpush1.bf16.msra.mxu0 0
  %98 = vmatprep.subr.bf16.mxu0 0
  %99 = vmatpush1.bf16.msra.mxu0 0
  %100 = vmatprep.subr.bf16.mxu0 0
  %101 = vmatpush1.bf16.msra.mxu0 0
  %102 = vmatprep.subr.bf16.mxu0 0
  %103 = vmatpush1.bf16.msra.mxu0 0
  %104 = vmatprep.subr.bf16.mxu0 0
  %105 = vmatpush1.bf16.msra.mxu0 0
  %106 = vmatprep.subr.bf16.mxu0 0
  %107 = vmatpush1.bf16.msra.mxu0 0
  %108 = vmatprep.subr.bf16.mxu0 0
  %109 = vmatpush1.bf16.msra.mxu0 0
  %110 = vmatprep.subr.bf16.mxu0 0
  %111 = vmatpush1.bf16.msra.mxu0 0
  %112 = vmatprep.subr.bf16.mxu0 0
  %113 = vmatpush1.bf16.msra.mxu0 0
  %114 = vmatprep.subr.bf16.mxu0 0
  %115 = vmatpush1.bf16.msra.mxu0 0
  %116 = vmatprep.mubr.bf16.mxu0 0
  %117 = vmatmul.mubr.bf16.gmra.mrb[0].mxu0 %v79
  %v118 = vpop.f32.mrb[0].mxu0
  %v119 = vadd.f32 %v41, %v118
  %v120 = vpop.f32.mrb[0].mxu0
  %v121 = vpop.f32.mrb[0].mxu0
  %v122 = vadd.f32 %v41, %v121
  %v123 = vpop.f32.mrb[0].mxu0
  %124 = vmatprep.mubr.bf16.mxu0 0
  %125 = vmatmul.mubr.bf16.gmra.mrb[0].mxu0 %v82
  %v126 = vpop.f32.mrb[0].mxu0
  %v127 = vadd.f32 %v41, %v126
  %v128 = vpop.f32.mrb[0].mxu0
  %v129 = vpop.f32.mrb[0].mxu0
  %v130 = vadd.f32 %v41, %v129
  %v131 = vpop.f32.mrb[0].mxu0
  %132 = vdwg.mxu0
  %v133 = vmax.f32 %v119, 0.0
  %v134 = vmax.f32 %v122, 0.0
  %v135 = vmax.f32 %v127, 0.0
  %v136 = vmax.f32 %v130, 0.0
  %v137 = vpack.c.bf16 %v134, %v133
  %v138 = vpack.c.bf16 %v136, %v135
  %vm139 = vcmask 253952
  %140 = vst.msk [vmem:[#allocation2] sm:$0x1] %vm139, %v137
  %v143 = vunpack.c.l.s4 1966171168
  %v144 = vunpack.c.0.s8 %v143
  %v145 = vlaneseq
  %v146 = vshrl.u32 %v145, 7
  %v147 = vsub.s32 %v144, %v146
  %v148 = vrot.slane %v137, %v147
  %v149 = vcombine.high %v148, %v148
  %v151 = vunpack.c.l.s4 1966171168
  %v152 = vunpack.c.0.s8 %v151
  %v153 = vlaneseq
  %v154 = vshrl.u32 %v153, 7
  %v155 = vsub.s32 %v152, %v154
  %v156 = vrot.slane %v148, %v155
  %v158 = vunpack.c.l.s4 1966171168
  %v159 = vunpack.c.0.s8 %v158
  %v160 = vlaneseq
  %v161 = vshrl.u32 %v160, 7
  %v162 = vsub.s32 %v159, %v161
  %v163 = vrot.slane %v149, %v162
  %164 = vrot.lane.b32.xlu0 %v163, 32
  %v165 = vpop.permute.xlu0 %164
  %vm167 = vcmask 516352
  %168 = vst.msk [vmem:[#allocation2] sm:$0x1] %vm167, %v165
  %v169 = vcombine.high %v156, %v156
  %170 = vrot.lane.b32.xlu0 %v169, 64
  %v171 = vpop.permute.xlu0 %170
  %vm173 = vcmask 778752
  %174 = vst.msk [vmem:[#allocation2] sm:$0x1] %vm173, %v171
  %v175 = vcombine.high %v163, %v163
  %176 = vrot.lane.b32.xlu0 %v175, 96
  %v177 = vpop.permute.xlu0 %176
  %vm179 = vcmask 1041152
  %180 = vst.msk [vmem:[#allocation2] sm:$0x1] %vm179, %v177
  %v181 = vcombine.high %v137, %v137
  %v183 = vunpack.c.l.s4 1966171168
  %v184 = vunpack.c.0.s8 %v183
  %v185 = vlaneseq
  %v186 = vshrl.u32 %v185, 7
  %v187 = vsub.s32 %v184, %v186
  %v188 = vrot.slane %v181, %v187
  %v190 = vunpack.c.l.s4 1966171168
  %v191 = vunpack.c.0.s8 %v190
  %v192 = vlaneseq
  %v193 = vshrl.u32 %v192, 7
  %v194 = vsub.s32 %v191, %v193
  %v195 = vrot.slane %v188, %v194
  %197 = vst.msk [vmem:[#allocation2 + $0x1] sm:$0x1] %vm139, %v195
  %v198 = vcombine.high %v188, %v188
  %v200 = vunpack.c.l.s4 1966171168
  %v201 = vunpack.c.0.s8 %v200
  %v202 = vlaneseq
  %v203 = vshrl.u32 %v202, 7
  %v204 = vsub.s32 %v201, %v203
  %v205 = vrot.slane %v198, %v204
  %206 = vrot.lane.b32.xlu0 %v205, 32
  %v207 = vpop.permute.xlu0 %206
  %209 = vst.msk [vmem:[#allocation2 + $0x1] sm:$0x1] %vm167, %v207
  %v210 = vcombine.high %v195, %v195
  %211 = vrot.lane.b32.xlu0 %v210, 64
  %v212 = vpop.permute.xlu0 %211
  %214 = vst.msk [vmem:[#allocation2 + $0x1] sm:$0x1] %vm173, %v212
  %v215 = vcombine.high %v205, %v205
  %216 = vrot.lane.b32.xlu0 %v215, 96
  %v217 = vpop.permute.xlu0 %216
  %219 = vst.msk [vmem:[#allocation2 + $0x1] sm:$0x1] %vm179, %v217
  %220 = vst.msk [vmem:[#allocation2 + $0x2] sm:$0x1] %vm139, %v138
  %v223 = vunpack.c.l.s4 1966171168
  %v224 = vunpack.c.0.s8 %v223
  %v225 = vlaneseq
  %v226 = vshrl.u32 %v225, 7
  %v227 = vsub.s32 %v224, %v226
  %v228 = vrot.slane %v138, %v227
  %v229 = vcombine.high %v228, %v228
  %v231 = vunpack.c.l.s4 1966171168
  %v232 = vunpack.c.0.s8 %v231
  %v233 = vlaneseq
  %v234 = vshrl.u32 %v233, 7
  %v235 = vsub.s32 %v232, %v234
  %v236 = vrot.slane %v228, %v235
  %v238 = vunpack.c.l.s4 1966171168
  %v239 = vunpack.c.0.s8 %v238
  %v240 = vlaneseq
  %v241 = vshrl.u32 %v240, 7
  %v242 = vsub.s32 %v239, %v241
  %v243 = vrot.slane %v229, %v242
  %244 = vrot.lane.b32.xlu0 %v243, 32
  %v245 = vpop.permute.xlu0 %244
  %247 = vst.msk [vmem:[#allocation2 + $0x2] sm:$0x1] %vm167, %v245
  %v248 = vcombine.high %v236, %v236
  %249 = vrot.lane.b32.xlu0 %v248, 64
  %v250 = vpop.permute.xlu0 %249
  %252 = vst.msk [vmem:[#allocation2 + $0x2] sm:$0x1] %vm173, %v250
  %v253 = vcombine.high %v243, %v243
  %254 = vrot.lane.b32.xlu0 %v253, 96
  %v255 = vpop.permute.xlu0 %254
  %257 = vst.msk [vmem:[#allocation2 + $0x2] sm:$0x1] %vm179, %v255
  %v258 = vcombine.high %v138, %v138
  %v260 = vunpack.c.l.s4 1966171168
  %v261 = vunpack.c.0.s8 %v260
  %v262 = vlaneseq
  %v263 = vshrl.u32 %v262, 7
  %v264 = vsub.s32 %v261, %v263
  %v265 = vrot.slane %v258, %v264
  %v267 = vunpack.c.l.s4 1966171168
  %v268 = vunpack.c.0.s8 %v267
  %v269 = vlaneseq
  %v270 = vshrl.u32 %v269, 7
  %v271 = vsub.s32 %v268, %v270
  %v272 = vrot.slane %v265, %v271
  %274 = vst.msk [vmem:[#allocation2 + $0x3] sm:$0x1] %vm139, %v272
  %v275 = vcombine.high %v265, %v265
  %v277 = vunpack.c.l.s4 1966171168
  %v278 = vunpack.c.0.s8 %v277
  %v279 = vlaneseq
  %v280 = vshrl.u32 %v279, 7
  %v281 = vsub.s32 %v278, %v280
  %v282 = vrot.slane %v275, %v281
  %283 = vrot.lane.b32.xlu0 %v282, 32
  %v284 = vpop.permute.xlu0 %283
  %286 = vst.msk [vmem:[#allocation2 + $0x3] sm:$0x1] %vm167, %v284
  %v287 = vcombine.high %v272, %v272
  %288 = vrot.lane.b32.xlu0 %v287, 64
  %v289 = vpop.permute.xlu0 %288
  %291 = vst.msk [vmem:[#allocation2 + $0x3] sm:$0x1] %vm173, %v289
  %v292 = vcombine.high %v282, %v282
  %293 = vrot.lane.b32.xlu0 %v292, 96
  %v294 = vpop.permute.xlu0 %293
  %296 = vst.msk [vmem:[#allocation2 + $0x3] sm:$0x1] %vm179, %v294
  %v297 = vld [vmem:[#allocation2] sm:$0xf]
  %v298 = vld [vmem:[%s3] sm:$0xf]
  %v299 = vld [vmem:[%s3 + $0x4] sm:$0xf]
  %v300 = vld [vmem:[%s3 + $0x8] sm:$0xf]
  %v301 = vld [vmem:[%s3 + $0xc] sm:$0xf]
  %v302 = vld [vmem:[%s3 + $0x10] sm:$0xf]
  %v303 = vld [vmem:[%s3 + $0x14] sm:$0xf]
  %v304 = vld [vmem:[%s3 + $0x18] sm:$0xf]
  %v305 = vld [vmem:[%s3 + $0x1c] sm:$0xf]
  %v306 = vld [vmem:[%s3 + $0x20] sm:$0xf]
  %v307 = vld [vmem:[%s3 + $0x24] sm:$0xf]
  %v308 = vld [vmem:[%s3 + $0x28] sm:$0xf]
  %v309 = vld [vmem:[%s3 + $0x2c] sm:$0xf]
  %v310 = vld [vmem:[%s3 + $0x30] sm:$0xf]
  %v311 = vld [vmem:[%s3 + $0x34] sm:$0xf]
  %v312 = vld [vmem:[%s3 + $0x38] sm:$0xf]
  %v313 = vld [vmem:[%s3 + $0x3c] sm:$0xf]
  %v314 = vld [vmem:[%s3 + $0x40] sm:$0xf]
  %v315 = vld [vmem:[%s3 + $0x44] sm:$0xf]
  %v316 = vld [vmem:[%s3 + $0x48] sm:$0xf]
  %v317 = vld [vmem:[%s3 + $0x4c] sm:$0xf]
  %v318 = vld [vmem:[%s3 + $0x50] sm:$0xf]
  %v319 = vld [vmem:[%s3 + $0x54] sm:$0xf]
  %v320 = vld [vmem:[%s3 + $0x58] sm:$0xf]
  %v321 = vld [vmem:[%s3 + $0x5c] sm:$0xf]
  %v322 = vld [vmem:[%s3 + $0x60] sm:$0xf]
  %v323 = vld [vmem:[%s3 + $0x64] sm:$0xf]
  %v324 = vld [vmem:[%s3 + $0x68] sm:$0xf]
  %v325 = vld [vmem:[%s3 + $0x6c] sm:$0xf]
  %v326 = vld [vmem:[%s3 + $0x70] sm:$0xf]
  %v327 = vld [vmem:[%s3 + $0x74] sm:$0xf]
  %v328 = vld [vmem:[%s3 + $0x78] sm:$0xf]
  %v329 = vld [vmem:[%s3 + $0x7c] sm:$0xf]
  %v330 = vld [vmem:[%s3 + $0x80] sm:$0xf]
  %v331 = vld [vmem:[%s3 + $0x84] sm:$0xf]
  %v332 = vld [vmem:[%s3 + $0x88] sm:$0xf]
  %v333 = vld [vmem:[%s3 + $0x8c] sm:$0xf]
  %v334 = vld [vmem:[%s3 + $0x90] sm:$0xf]
  %v335 = vld [vmem:[%s3 + $0x94] sm:$0xf]
  %v336 = vld [vmem:[%s3 + $0x98] sm:$0xf]
  %v337 = vld [vmem:[%s3 + $0x9c] sm:$0xf]
  %v338 = vld [vmem:[%s3 + $0xa0] sm:$0xf]
  %v339 = vld [vmem:[%s3 + $0xa4] sm:$0xf]
  %v340 = vld [vmem:[%s3 + $0xa8] sm:$0xf]
  %v341 = vld [vmem:[%s3 + $0xac] sm:$0xf]
  %v342 = vld [vmem:[%s3 + $0xb0] sm:$0xf]
  %v343 = vld [vmem:[%s3 + $0xb4] sm:$0xf]
  %v344 = vld [vmem:[%s3 + $0xb8] sm:$0xf]
  %v345 = vld [vmem:[%s3 + $0xbc] sm:$0xf]
  %v346 = vld [vmem:[%s3 + $0xc0] sm:$0xf]
  %v347 = vld [vmem:[%s3 + $0xc4] sm:$0xf]
  %v348 = vld [vmem:[%s3 + $0xc8] sm:$0xf]
  %v349 = vld [vmem:[%s3 + $0xcc] sm:$0xf]
  %v350 = vld [vmem:[%s3 + $0xd0] sm:$0xf]
  %v351 = vld [vmem:[%s3 + $0xd4] sm:$0xf]
  %v352 = vld [vmem:[%s3 + $0xd8] sm:$0xf]
  %v353 = vld [vmem:[%s3 + $0xdc] sm:$0xf]
  %v354 = vld [vmem:[%s3 + $0xe0] sm:$0xf]
  %v355 = vld [vmem:[%s3 + $0xe4] sm:$0xf]
  %v356 = vld [vmem:[%s3 + $0xe8] sm:$0xf]
  %v357 = vld [vmem:[%s3 + $0xec] sm:$0xf]
  %v358 = vld [vmem:[%s3 + $0xf0] sm:$0xf]
  %v359 = vld [vmem:[%s3 + $0xf4] sm:$0xf]
  %v360 = vld [vmem:[%s3 + $0xf8] sm:$0xf]
  %v361 = vld [vmem:[%s3 + $0xfc] sm:$0xf]
  %v364 = vunpack.c.l.s4 1966171168
  %v365 = vunpack.c.0.s8 %v364
  %v366 = vlaneseq
  %v367 = vshrl.u32 %v366, 7
  %v368 = vsub.s32 %v365, %v367
  %v369 = vrot.slane %v297, %v368
  %v370 = vcombine.high %v369, %v369
  %v372 = vunpack.c.l.s4 1966171168
  %v373 = vunpack.c.0.s8 %v372
  %v374 = vlaneseq
  %v375 = vshrl.u32 %v374, 7
  %v376 = vsub.s32 %v373, %v375
  %v377 = vrot.slane %v369, %v376
  %v379 = vunpack.c.l.s4 1966171168
  %v380 = vunpack.c.0.s8 %v379
  %v381 = vlaneseq
  %v382 = vshrl.u32 %v381, 7
  %v383 = vsub.s32 %v380, %v382
  %v384 = vrot.slane %v370, %v383
  %v385 = vcombine.high %v377, %v377
  %v386 = vcombine.high %v384, %v384
  %v455 = vunpack.c.l.b16 %v298
  %v456 = vunpack.c.l.b16 %v299
  %v457 = vunpack.c.l.b16 %v300
  %v458 = vunpack.c.l.b16 %v301
  %v459 = vunpack.c.l.b16 %v302
  %v460 = vunpack.c.l.b16 %v303
  %v461 = vunpack.c.l.b16 %v304
  %v462 = vunpack.c.l.b16 %v305
  %v463 = vunpack.c.l.b16 %v306
  %v464 = vunpack.c.l.b16 %v307
  %v465 = vunpack.c.l.b16 %v308
  %v466 = vunpack.c.l.b16 %v309
  %v467 = vunpack.c.l.b16 %v310
  %v468 = vunpack.c.l.b16 %v311
  %v469 = vunpack.c.l.b16 %v312
  %v470 = vunpack.c.l.b16 %v313
  %v471 = vunpack.c.l.b16 %v314
  %v472 = vunpack.c.l.b16 %v315
  %v473 = vunpack.c.l.b16 %v316
  %v474 = vunpack.c.l.b16 %v317
  %v475 = vunpack.c.l.b16 %v318
  %v476 = vunpack.c.l.b16 %v319
  %v477 = vunpack.c.l.b16 %v320
  %v478 = vunpack.c.l.b16 %v321
  %v479 = vunpack.c.l.b16 %v322
  %v480 = vunpack.c.l.b16 %v323
  %v481 = vunpack.c.l.b16 %v324
  %v482 = vunpack.c.l.b16 %v325
  %v483 = vunpack.c.l.b16 %v326
  %v484 = vunpack.c.l.b16 %v327
  %v485 = vunpack.c.l.b16 %v328
  %v486 = vunpack.c.l.b16 %v329
  %v487 = vunpack.c.l.b16 %v330
  %v488 = vunpack.c.l.b16 %v331
  %v489 = vunpack.c.l.b16 %v332
  %v490 = vunpack.c.l.b16 %v333
  %v491 = vunpack.c.l.b16 %v334
  %v492 = vunpack.c.l.b16 %v335
  %v493 = vunpack.c.l.b16 %v336
  %v494 = vunpack.c.l.b16 %v337
  %v495 = vunpack.c.l.b16 %v338
  %v496 = vunpack.c.l.b16 %v339
  %v497 = vunpack.c.l.b16 %v340
  %v498 = vunpack.c.l.b16 %v341
  %v499 = vunpack.c.l.b16 %v342
  %v500 = vunpack.c.l.b16 %v343
  %v501 = vunpack.c.l.b16 %v344
  %v502 = vunpack.c.l.b16 %v345
  %v503 = vunpack.c.l.b16 %v346
  %v504 = vunpack.c.l.b16 %v347
  %v505 = vunpack.c.l.b16 %v348
  %v506 = vunpack.c.l.b16 %v349
  %v507 = vunpack.c.l.b16 %v350
  %v508 = vunpack.c.l.b16 %v351
  %v509 = vunpack.c.l.b16 %v352
  %v510 = vunpack.c.l.b16 %v353
  %v511 = vunpack.c.l.b16 %v354
  %v512 = vunpack.c.l.b16 %v355
  %v513 = vunpack.c.l.b16 %v356
  %v514 = vunpack.c.l.b16 %v357
  %v515 = vunpack.c.l.b16 %v358
  %v516 = vunpack.c.l.b16 %v359
  %v517 = vunpack.c.l.b16 %v360
  %v518 = vunpack.c.l.b16 %v361
  %v519 = vpack.c.b16 %v456, %v455
  %v520 = vpack.c.b16 %v458, %v457
  %v521 = vpack.c.b16 %v460, %v459
  %v522 = vpack.c.b16 %v462, %v461
  %v523 = vpack.c.b16 %v464, %v463
  %v524 = vpack.c.b16 %v466, %v465
  %v525 = vpack.c.b16 %v468, %v467
  %v526 = vpack.c.b16 %v470, %v469
  %v527 = vpack.c.b16 %v472, %v471
  %v528 = vpack.c.b16 %v474, %v473
  %v529 = vpack.c.b16 %v476, %v475
  %v530 = vpack.c.b16 %v478, %v477
  %v531 = vpack.c.b16 %v480, %v479
  %v532 = vpack.c.b16 %v482, %v481
  %v533 = vpack.c.b16 %v484, %v483
  %v534 = vpack.c.b16 %v486, %v485
  %v535 = vpack.c.b16 %v488, %v487
  %v536 = vpack.c.b16 %v490, %v489
  %v537 = vpack.c.b16 %v492, %v491
  %v538 = vpack.c.b16 %v494, %v493
  %v539 = vpack.c.b16 %v496, %v495
  %v540 = vpack.c.b16 %v498, %v497
  %v541 = vpack.c.b16 %v500, %v499
  %v542 = vpack.c.b16 %v502, %v501
  %v543 = vpack.c.b16 %v504, %v503
  %v544 = vpack.c.b16 %v506, %v505
  %v545 = vpack.c.b16 %v508, %v507
  %v546 = vpack.c.b16 %v510, %v509
  %v547 = vpack.c.b16 %v512, %v511
  %v548 = vpack.c.b16 %v514, %v513
  %v549 = vpack.c.b16 %v516, %v515
  %v550 = vpack.c.b16 %v518, %v517
  %583 = vmatprep.subr.bf16.mxu0 0
  %584 = vmatpush1.bf16.msra.mxu0 %v519
  %585 = vmatprep.subr.bf16.mxu0 0
  %586 = vmatpush1.bf16.msra.mxu0 %v520
  %587 = vmatprep.subr.bf16.mxu0 0
  %588 = vmatpush1.bf16.msra.mxu0 %v521
  %589 = vmatprep.subr.bf16.mxu0 0
  %590 = vmatpush1.bf16.msra.mxu0 %v522
  %591 = vmatprep.subr.bf16.mxu0 0
  %592 = vmatpush1.bf16.msra.mxu0 %v523
  %593 = vmatprep.subr.bf16.mxu0 0
  %594 = vmatpush1.bf16.msra.mxu0 %v524
  %595 = vmatprep.subr.bf16.mxu0 0
  %596 = vmatpush1.bf16.msra.mxu0 %v525
  %597 = vmatprep.subr.bf16.mxu0 0
  %598 = vmatpush1.bf16.msra.mxu0 %v526
  %599 = vmatprep.subr.bf16.mxu0 0
  %600 = vmatpush1.bf16.msra.mxu0 %v527
  %601 = vmatprep.subr.bf16.mxu0 0
  %602 = vmatpush1.bf16.msra.mxu0 %v528
  %603 = vmatprep.subr.bf16.mxu0 0
  %604 = vmatpush1.bf16.msra.mxu0 %v529
  %605 = vmatprep.subr.bf16.mxu0 0
  %606 = vmatpush1.bf16.msra.mxu0 %v530
  %607 = vmatprep.subr.bf16.mxu0 0
  %608 = vmatpush1.bf16.msra.mxu0 %v531
  %609 = vmatprep.subr.bf16.mxu0 0
  %610 = vmatpush1.bf16.msra.mxu0 %v532
  %611 = vmatprep.subr.bf16.mxu0 0
  %612 = vmatpush1.bf16.msra.mxu0 %v533
  %613 = vmatprep.subr.bf16.mxu0 0
  %614 = vmatpush1.bf16.msra.mxu0 %v534
  %615 = vmatprep.mubr.bf16.mxu0 %v384
  %616 = vmatmul.mubr.bf16.gmra.mrb[0].mxu0 %v377
  %v617 = vpop.f32.mrb[0].mxu0
  %v618 = vadd.f32 0.0, %v617
  %v619 = vpop.f32.mrb[0].mxu0
  %v620 = vpop.f32.mrb[0].mxu0
  %v621 = vpop.f32.mrb[0].mxu0
  %622 = vdwg.mxu0
  %623 = vmatprep.subr.bf16.mxu0 0
  %624 = vmatpush1.bf16.msra.mxu0 %v535
  %625 = vmatprep.subr.bf16.mxu0 0
  %626 = vmatpush1.bf16.msra.mxu0 %v536
  %627 = vmatprep.subr.bf16.mxu0 0
  %628 = vmatpush1.bf16.msra.mxu0 %v537
  %629 = vmatprep.subr.bf16.mxu0 0
  %630 = vmatpush1.bf16.msra.mxu0 %v538
  %631 = vmatprep.subr.bf16.mxu0 0
  %632 = vmatpush1.bf16.msra.mxu0 %v539
  %633 = vmatprep.subr.bf16.mxu0 0
  %634 = vmatpush1.bf16.msra.mxu0 %v540
  %635 = vmatprep.subr.bf16.mxu0 0
  %636 = vmatpush1.bf16.msra.mxu0 %v541
  %637 = vmatprep.subr.bf16.mxu0 0
  %638 = vmatpush1.bf16.msra.mxu0 %v542
  %639 = vmatprep.subr.bf16.mxu0 0
  %640 = vmatpush1.bf16.msra.mxu0 %v543
  %641 = vmatprep.subr.bf16.mxu0 0
  %642 = vmatpush1.bf16.msra.mxu0 %v544
  %643 = vmatprep.subr.bf16.mxu0 0
  %644 = vmatpush1.bf16.msra.mxu0 %v545
  %645 = vmatprep.subr.bf16.mxu0 0
  %646 = vmatpush1.bf16.msra.mxu0 %v546
  %647 = vmatprep.subr.bf16.mxu0 0
  %648 = vmatpush1.bf16.msra.mxu0 %v547
  %649 = vmatprep.subr.bf16.mxu0 0
  %650 = vmatpush1.bf16.msra.mxu0 %v548
  %651 = vmatprep.subr.bf16.mxu0 0
  %652 = vmatpush1.bf16.msra.mxu0 %v549
  %653 = vmatprep.subr.bf16.mxu0 0
  %654 = vmatpush1.bf16.msra.mxu0 %v550
  %655 = vmatprep.mubr.bf16.mxu0 %v386
  %656 = vmatmul.mubr.bf16.gmra.mrb[0].mxu0 %v385
  %v657 = vpop.f32.mrb[0].mxu0
  %v658 = vadd.f32 %v618, %v657
  %v659 = vpop.f32.mrb[0].mxu0
  %v660 = vpop.f32.mrb[0].mxu0
  %v661 = vpop.f32.mrb[0].mxu0
  %662 = vdwg.mxu0
  %v663 = vpack.c.bf16 %v658, %v658
  %v664 = vld [vmem:[%s4] sm:$0xff]
  %v665 = vld [vmem:[%s4 + $0x8] sm:$0xff]
  %v666 = vld [vmem:[%s4 + $0x10] sm:$0xff]
  %v667 = vld [vmem:[%s4 + $0x18] sm:$0xff]
  %v668 = vld [vmem:[%s4 + $0x20] sm:$0xff]
  %v669 = vld [vmem:[%s4 + $0x28] sm:$0xff]
  %v670 = vld [vmem:[%s4 + $0x30] sm:$0xff]
  %v671 = vld [vmem:[%s4 + $0x38] sm:$0xff]
  %v672 = vld [vmem:[%s4 + $0x40] sm:$0xff]
  %v673 = vld [vmem:[%s4 + $0x48] sm:$0xff]
  %v674 = vld [vmem:[%s4 + $0x50] sm:$0xff]
  %v675 = vld [vmem:[%s4 + $0x58] sm:$0xff]
  %v676 = vld [vmem:[%s4 + $0x60] sm:$0xff]
  %v677 = vld [vmem:[%s4 + $0x68] sm:$0xff]
  %v678 = vld [vmem:[%s4 + $0x70] sm:$0xff]
  %v679 = vld [vmem:[%s4 + $0x78] sm:$0xff]
  %v680 = vld [vmem:[%s4 + $0x80] sm:$0xff]
  %v681 = vld [vmem:[%s4 + $0x88] sm:$0xff]
  %v682 = vld [vmem:[%s4 + $0x90] sm:$0xff]
  %v683 = vld [vmem:[%s4 + $0x98] sm:$0xff]
  %v684 = vld [vmem:[%s4 + $0xa0] sm:$0xff]
  %v685 = vld [vmem:[%s4 + $0xa8] sm:$0xff]
  %v686 = vld [vmem:[%s4 + $0xb0] sm:$0xff]
  %v687 = vld [vmem:[%s4 + $0xb8] sm:$0xff]
  %v688 = vld [vmem:[%s4 + $0xc0] sm:$0xff]
  %v689 = vld [vmem:[%s4 + $0xc8] sm:$0xff]
  %v690 = vld [vmem:[%s4 + $0xd0] sm:$0xff]
  %v691 = vld [vmem:[%s4 + $0xd8] sm:$0xff]
  %v692 = vld [vmem:[%s4 + $0xe0] sm:$0xff]
  %v693 = vld [vmem:[%s4 + $0xe8] sm:$0xff]
  %v694 = vld [vmem:[%s4 + $0xf0] sm:$0xff]
  %v695 = vld [vmem:[%s4 + $0xf8] sm:$0xff]
  %v696 = vld [vmem:[%s4 + $0x100] sm:$0xff]
  %v697 = vld [vmem:[%s4 + $0x108] sm:$0xff]
  %v698 = vld [vmem:[%s4 + $0x110] sm:$0xff]
  %v699 = vld [vmem:[%s4 + $0x118] sm:$0xff]
  %v700 = vld [vmem:[%s4 + $0x120] sm:$0xff]
  %v701 = vld [vmem:[%s4 + $0x128] sm:$0xff]
  %v702 = vld [vmem:[%s4 + $0x130] sm:$0xff]
  %v703 = vld [vmem:[%s4 + $0x138] sm:$0xff]
  %v704 = vld [vmem:[%s4 + $0x140] sm:$0xff]
  %v705 = vld [vmem:[%s4 + $0x148] sm:$0xff]
  %v706 = vld [vmem:[%s4 + $0x150] sm:$0xff]
  %v707 = vld [vmem:[%s4 + $0x158] sm:$0xff]
  %v708 = vld [vmem:[%s4 + $0x160] sm:$0xff]
  %v709 = vld [vmem:[%s4 + $0x168] sm:$0xff]
  %v710 = vld [vmem:[%s4 + $0x170] sm:$0xff]
  %v711 = vld [vmem:[%s4 + $0x178] sm:$0xff]
  %v712 = vld [vmem:[%s4 + $0x180] sm:$0xff]
  %v713 = vld [vmem:[%s4 + $0x188] sm:$0xff]
  %v714 = vld [vmem:[%s4 + $0x190] sm:$0xff]
  %v715 = vld [vmem:[%s4 + $0x198] sm:$0xff]
  %v716 = vld [vmem:[%s4 + $0x1a0] sm:$0xff]
  %v717 = vld [vmem:[%s4 + $0x1a8] sm:$0xff]
  %v718 = vld [vmem:[%s4 + $0x1b0] sm:$0xff]
  %v719 = vld [vmem:[%s4 + $0x1b8] sm:$0xff]
  %v720 = vld [vmem:[%s4 + $0x1c0] sm:$0xff]
  %v721 = vld [vmem:[%s4 + $0x1c8] sm:$0xff]
  %v722 = vld [vmem:[%s4 + $0x1d0] sm:$0xff]
  %v723 = vld [vmem:[%s4 + $0x1d8] sm:$0xff]
  %v724 = vld [vmem:[%s4 + $0x1e0] sm:$0xff]
  %v725 = vld [vmem:[%s4 + $0x1e8] sm:$0xff]
  %v726 = vld [vmem:[%s4 + $0x1f0] sm:$0xff]
  %v727 = vld [vmem:[%s4 + $0x1f8] sm:$0xff]
  %v728 = vld [vmem:[%s4 + $0x200] sm:$0xff]
  %v729 = vld [vmem:[%s4 + $0x208] sm:$0xff]
  %v730 = vld [vmem:[%s4 + $0x210] sm:$0xff]
  %v731 = vld [vmem:[%s4 + $0x218] sm:$0xff]
  %v732 = vld [vmem:[%s4 + $0x220] sm:$0xff]
  %v733 = vld [vmem:[%s4 + $0x228] sm:$0xff]
  %v734 = vld [vmem:[%s4 + $0x230] sm:$0xff]
  %v735 = vld [vmem:[%s4 + $0x238] sm:$0xff]
  %v736 = vld [vmem:[%s4 + $0x240] sm:$0xff]
  %v737 = vld [vmem:[%s4 + $0x248] sm:$0xff]
  %v738 = vld [vmem:[%s4 + $0x250] sm:$0xff]
  %v739 = vld [vmem:[%s4 + $0x258] sm:$0xff]
  %v740 = vld [vmem:[%s4 + $0x260] sm:$0xff]
  %v741 = vld [vmem:[%s4 + $0x268] sm:$0xff]
  %v742 = vld [vmem:[%s4 + $0x270] sm:$0xff]
  %v743 = vld [vmem:[%s4 + $0x278] sm:$0xff]
  %v744 = vld [vmem:[%s4 + $0x280] sm:$0xff]
  %v745 = vld [vmem:[%s4 + $0x288] sm:$0xff]
  %v746 = vld [vmem:[%s4 + $0x290] sm:$0xff]
  %v747 = vld [vmem:[%s4 + $0x298] sm:$0xff]
  %v748 = vld [vmem:[%s4 + $0x2a0] sm:$0xff]
  %v749 = vld [vmem:[%s4 + $0x2a8] sm:$0xff]
  %v750 = vld [vmem:[%s4 + $0x2b0] sm:$0xff]
  %v751 = vld [vmem:[%s4 + $0x2b8] sm:$0xff]
  %v752 = vld [vmem:[%s4 + $0x2c0] sm:$0xff]
  %v753 = vld [vmem:[%s4 + $0x2c8] sm:$0xff]
  %v754 = vld [vmem:[%s4 + $0x2d0] sm:$0xff]
  %v755 = vld [vmem:[%s4 + $0x2d8] sm:$0xff]
  %v756 = vld [vmem:[%s4 + $0x2e0] sm:$0xff]
  %v757 = vld [vmem:[%s4 + $0x2e8] sm:$0xff]
  %v758 = vld [vmem:[%s4 + $0x2f0] sm:$0xff]
  %v759 = vld [vmem:[%s4 + $0x2f8] sm:$0xff]
  %v760 = vld [vmem:[%s4 + $0x300] sm:$0xff]
  %v761 = vld [vmem:[%s4 + $0x308] sm:$0xff]
  %v762 = vld [vmem:[%s4 + $0x310] sm:$0xff]
  %v763 = vld [vmem:[%s4 + $0x318] sm:$0xff]
  %v764 = vld [vmem:[%s4 + $0x320] sm:$0xff]
  %v765 = vld [vmem:[%s4 + $0x328] sm:$0xff]
  %v766 = vld [vmem:[%s4 + $0x330] sm:$0xff]
  %v767 = vld [vmem:[%s4 + $0x338] sm:$0xff]
  %v768 = vld [vmem:[%s4 + $0x340] sm:$0xff]
  %v769 = vld [vmem:[%s4 + $0x348] sm:$0xff]
  %v770 = vld [vmem:[%s4 + $0x350] sm:$0xff]
  %v771 = vld [vmem:[%s4 + $0x358] sm:$0xff]
  %v772 = vld [vmem:[%s4 + $0x360] sm:$0xff]
  %v773 = vld [vmem:[%s4 + $0x368] sm:$0xff]
  %v774 = vld [vmem:[%s4 + $0x370] sm:$0xff]
  %v775 = vld [vmem:[%s4 + $0x378] sm:$0xff]
  %v776 = vld [vmem:[%s4 + $0x380] sm:$0xff]
  %v777 = vld [vmem:[%s4 + $0x388] sm:$0xff]
  %v778 = vld [vmem:[%s4 + $0x390] sm:$0xff]
  %v779 = vld [vmem:[%s4 + $0x398] sm:$0xff]
  %v780 = vld [vmem:[%s4 + $0x3a0] sm:$0xff]
  %v781 = vld [vmem:[%s4 + $0x3a8] sm:$0xff]
  %v782 = vld [vmem:[%s4 + $0x3b0] sm:$0xff]
  %v783 = vld [vmem:[%s4 + $0x3b8] sm:$0xff]
  %v784 = vld [vmem:[%s4 + $0x3c0] sm:$0xff]
  %v785 = vld [vmem:[%s4 + $0x3c8] sm:$0xff]
  %v786 = vld [vmem:[%s4 + $0x3d0] sm:$0xff]
  %v787 = vld [vmem:[%s4 + $0x3d8] sm:$0xff]
  %v788 = vld [vmem:[%s4 + $0x3e0] sm:$0xff]
  %v789 = vld [vmem:[%s4 + $0x3e8] sm:$0xff]
  %v790 = vld [vmem:[%s4 + $0x3f0] sm:$0xff]
  %v791 = vld [vmem:[%s4 + $0x3f8] sm:$0xff]
  %v792 = vld [vmem:[%s5] sm:$0xff]
  %v793 = vld [vmem:[%s5 + $0x8] sm:$0xff]
  %v796 = vlaneseq
  %v797 = vshrl.u32 %v796, 7
  %v798 = vsub.s32 0, %v797
  %v799 = vrot.slane %v792, %v798
  %v800 = vlaneseq
  %v801 = vshrl.u32 %v800, 7
  %v802 = vsub.s32 1, %v801
  %v803 = vrot.slane %v792, %v802
  %v804 = vlaneseq
  %v805 = vshrl.u32 %v804, 7
  %v806 = vsub.s32 2, %v805
  %v807 = vrot.slane %v792, %v806
  %v808 = vlaneseq
  %v809 = vshrl.u32 %v808, 7
  %v810 = vsub.s32 3, %v809
  %v811 = vrot.slane %v792, %v810
  %v812 = vlaneseq
  %v813 = vshrl.u32 %v812, 7
  %v814 = vsub.s32 4, %v813
  %v815 = vrot.slane %v792, %v814
  %v816 = vlaneseq
  %v817 = vshrl.u32 %v816, 7
  %v818 = vsub.s32 5, %v817
  %v819 = vrot.slane %v792, %v818
  %v820 = vlaneseq
  %v821 = vshrl.u32 %v820, 7
  %v822 = vsub.s32 6, %v821
  %v823 = vrot.slane %v792, %v822
  %v824 = vlaneseq
  %v825 = vshrl.u32 %v824, 7
  %v826 = vsub.s32 7, %v825
  %v827 = vrot.slane %v792, %v826
  %v828 = vlaneseq
  %v829 = vshrl.u32 %v828, 7
  %v830 = vsub.s32 0, %v829
  %v831 = vrot.slane %v793, %v830
  %v832 = vlaneseq
  %v833 = vshrl.u32 %v832, 7
  %v834 = vsub.s32 1, %v833
  %v835 = vrot.slane %v793, %v834
  %v836 = vlaneseq
  %v837 = vshrl.u32 %v836, 7
  %v838 = vsub.s32 2, %v837
  %v839 = vrot.slane %v793, %v838
  %v840 = vlaneseq
  %v841 = vshrl.u32 %v840, 7
  %v842 = vsub.s32 3, %v841
  %v843 = vrot.slane %v793, %v842
  %v844 = vlaneseq
  %v845 = vshrl.u32 %v844, 7
  %v846 = vsub.s32 4, %v845
  %v847 = vrot.slane %v793, %v846
  %v848 = vlaneseq
  %v849 = vshrl.u32 %v848, 7
  %v850 = vsub.s32 5, %v849
  %v851 = vrot.slane %v793, %v850
  %v852 = vlaneseq
  %v853 = vshrl.u32 %v852, 7
  %v854 = vsub.s32 6, %v853
  %v855 = vrot.slane %v793, %v854
  %v856 = vlaneseq
  %v857 = vshrl.u32 %v856, 7
  %v858 = vsub.s32 7, %v857
  %v859 = vrot.slane %v793, %v858
  %v1004 = vunpack.c.l.b16 %v664
  %v1005 = vunpack.c.h.b16 %v664
  %v1006 = vunpack.c.l.b16 %v665
  %v1007 = vunpack.c.h.b16 %v665
  %v1008 = vunpack.c.l.b16 %v666
  %v1009 = vunpack.c.h.b16 %v666
  %v1010 = vunpack.c.l.b16 %v667
  %v1011 = vunpack.c.h.b16 %v667
  %v1012 = vunpack.c.l.b16 %v668
  %v1013 = vunpack.c.h.b16 %v668
  %v1014 = vunpack.c.l.b16 %v669
  %v1015 = vunpack.c.h.b16 %v669
  %v1016 = vunpack.c.l.b16 %v670
  %v1017 = vunpack.c.h.b16 %v670
  %v1018 = vunpack.c.l.b16 %v671
  %v1019 = vunpack.c.h.b16 %v671
  %v1020 = vunpack.c.l.b16 %v672
  %v1021 = vunpack.c.h.b16 %v672
  %v1022 = vunpack.c.l.b16 %v673
  %v1023 = vunpack.c.h.b16 %v673
  %v1024 = vunpack.c.l.b16 %v674
  %v1025 = vunpack.c.h.b16 %v674
  %v1026 = vunpack.c.l.b16 %v675
  %v1027 = vunpack.c.h.b16 %v675
  %v1028 = vunpack.c.l.b16 %v676
  %v1029 = vunpack.c.h.b16 %v676
  %v1030 = vunpack.c.l.b16 %v677
  %v1031 = vunpack.c.h.b16 %v677
  %v1032 = vunpack.c.l.b16 %v678
  %v1033 = vunpack.c.h.b16 %v678
  %v1034 = vunpack.c.l.b16 %v679
  %v1035 = vunpack.c.h.b16 %v679
  %v1036 = vunpack.c.l.b16 %v680
  %v1037 = vunpack.c.h.b16 %v680
  %v1038 = vunpack.c.l.b16 %v681
  %v1039 = vunpack.c.h.b16 %v681
  %v1040 = vunpack.c.l.b16 %v682
  %v1041 = vunpack.c.h.b16 %v682
  %v1042 = vunpack.c.l.b16 %v683
  %v1043 = vunpack.c.h.b16 %v683
  %v1044 = vunpack.c.l.b16 %v684
  %v1045 = vunpack.c.h.b16 %v684
  %v1046 = vunpack.c.l.b16 %v685
  %v1047 = vunpack.c.h.b16 %v685
  %v1048 = vunpack.c.l.b16 %v686
  %v1049 = vunpack.c.h.b16 %v686
  %v1050 = vunpack.c.l.b16 %v687
  %v1051 = vunpack.c.h.b16 %v687
  %v1052 = vunpack.c.l.b16 %v688
  %v1053 = vunpack.c.h.b16 %v688
  %v1054 = vunpack.c.l.b16 %v689
  %v1055 = vunpack.c.h.b16 %v689
  %v1056 = vunpack.c.l.b16 %v690
  %v1057 = vunpack.c.h.b16 %v690
  %v1058 = vunpack.c.l.b16 %v691
  %v1059 = vunpack.c.h.b16 %v691
  %v1060 = vunpack.c.l.b16 %v692
  %v1061 = vunpack.c.h.b16 %v692
  %v1062 = vunpack.c.l.b16 %v693
  %v1063 = vunpack.c.h.b16 %v693
  %v1064 = vunpack.c.l.b16 %v694
  %v1065 = vunpack.c.h.b16 %v694
  %v1066 = vunpack.c.l.b16 %v695
  %v1067 = vunpack.c.h.b16 %v695
  %v1068 = vunpack.c.l.b16 %v696
  %v1069 = vunpack.c.h.b16 %v696
  %v1070 = vunpack.c.l.b16 %v697
  %v1071 = vunpack.c.h.b16 %v697
  %v1072 = vunpack.c.l.b16 %v698
  %v1073 = vunpack.c.h.b16 %v698
  %v1074 = vunpack.c.l.b16 %v699
  %v1075 = vunpack.c.h.b16 %v699
  %v1076 = vunpack.c.l.b16 %v700
  %v1077 = vunpack.c.h.b16 %v700
  %v1078 = vunpack.c.l.b16 %v701
  %v1079 = vunpack.c.h.b16 %v701
  %v1080 = vunpack.c.l.b16 %v702
  %v1081 = vunpack.c.h.b16 %v702
  %v1082 = vunpack.c.l.b16 %v703
  %v1083 = vunpack.c.h.b16 %v703
  %v1084 = vunpack.c.l.b16 %v704
  %v1085 = vunpack.c.h.b16 %v704
  %v1086 = vunpack.c.l.b16 %v705
  %v1087 = vunpack.c.h.b16 %v705
  %v1088 = vunpack.c.l.b16 %v706
  %v1089 = vunpack.c.h.b16 %v706
  %v1090 = vunpack.c.l.b16 %v707
  %v1091 = vunpack.c.h.b16 %v707
  %v1092 = vunpack.c.l.b16 %v708
  %v1093 = vunpack.c.h.b16 %v708
  %v1094 = vunpack.c.l.b16 %v709
  %v1095 = vunpack.c.h.b16 %v709
  %v1096 = vunpack.c.l.b16 %v710
  %v1097 = vunpack.c.h.b16 %v710
  %v1098 = vunpack.c.l.b16 %v711
  %v1099 = vunpack.c.h.b16 %v711
  %v1100 = vunpack.c.l.b16 %v712
  %v1101 = vunpack.c.h.b16 %v712
  %v1102 = vunpack.c.l.b16 %v713
  %v1103 = vunpack.c.h.b16 %v713
  %v1104 = vunpack.c.l.b16 %v714
  %v1105 = vunpack.c.h.b16 %v714
  %v1106 = vunpack.c.l.b16 %v715
  %v1107 = vunpack.c.h.b16 %v715
  %v1108 = vunpack.c.l.b16 %v716
  %v1109 = vunpack.c.h.b16 %v716
  %v1110 = vunpack.c.l.b16 %v717
  %v1111 = vunpack.c.h.b16 %v717
  %v1112 = vunpack.c.l.b16 %v718
  %v1113 = vunpack.c.h.b16 %v718
  %v1114 = vunpack.c.l.b16 %v719
  %v1115 = vunpack.c.h.b16 %v719
  %v1116 = vunpack.c.l.b16 %v720
  %v1117 = vunpack.c.h.b16 %v720
  %v1118 = vunpack.c.l.b16 %v721
  %v1119 = vunpack.c.h.b16 %v721
  %v1120 = vunpack.c.l.b16 %v722
  %v1121 = vunpack.c.h.b16 %v722
  %v1122 = vunpack.c.l.b16 %v723
  %v1123 = vunpack.c.h.b16 %v723
  %v1124 = vunpack.c.l.b16 %v724
  %v1125 = vunpack.c.h.b16 %v724
  %v1126 = vunpack.c.l.b16 %v725
  %v1127 = vunpack.c.h.b16 %v725
  %v1128 = vunpack.c.l.b16 %v726
  %v1129 = vunpack.c.h.b16 %v726
  %v1130 = vunpack.c.l.b16 %v727
  %v1131 = vunpack.c.h.b16 %v727
  %v1132 = vunpack.c.l.b16 %v728
  %v1133 = vunpack.c.h.b16 %v728
  %v1134 = vunpack.c.l.b16 %v729
  %v1135 = vunpack.c.h.b16 %v729
  %v1136 = vunpack.c.l.b16 %v730
  %v1137 = vunpack.c.h.b16 %v730
  %v1138 = vunpack.c.l.b16 %v731
  %v1139 = vunpack.c.h.b16 %v731
  %v1140 = vunpack.c.l.b16 %v732
  %v1141 = vunpack.c.h.b16 %v732
  %v1142 = vunpack.c.l.b16 %v733
  %v1143 = vunpack.c.h.b16 %v733
  %v1144 = vunpack.c.l.b16 %v734
  %v1145 = vunpack.c.h.b16 %v734
  %v1146 = vunpack.c.l.b16 %v735
  %v1147 = vunpack.c.h.b16 %v735
  %v1148 = vunpack.c.l.b16 %v736
  %v1149 = vunpack.c.h.b16 %v736
  %v1150 = vunpack.c.l.b16 %v737
  %v1151 = vunpack.c.h.b16 %v737
  %v1152 = vunpack.c.l.b16 %v738
  %v1153 = vunpack.c.h.b16 %v738
  %v1154 = vunpack.c.l.b16 %v739
  %v1155 = vunpack.c.h.b16 %v739
  %v1156 = vunpack.c.l.b16 %v740
  %v1157 = vunpack.c.h.b16 %v740
  %v1158 = vunpack.c.l.b16 %v741
  %v1159 = vunpack.c.h.b16 %v741
  %v1160 = vunpack.c.l.b16 %v742
  %v1161 = vunpack.c.h.b16 %v742
  %v1162 = vunpack.c.l.b16 %v743
  %v1163 = vunpack.c.h.b16 %v743
  %v1164 = vunpack.c.l.b16 %v744
  %v1165 = vunpack.c.h.b16 %v744
  %v1166 = vunpack.c.l.b16 %v745
  %v1167 = vunpack.c.h.b16 %v745
  %v1168 = vunpack.c.l.b16 %v746
  %v1169 = vunpack.c.h.b16 %v746
  %v1170 = vunpack.c.l.b16 %v747
  %v1171 = vunpack.c.h.b16 %v747
  %v1172 = vunpack.c.l.b16 %v748
  %v1173 = vunpack.c.h.b16 %v748
  %v1174 = vunpack.c.l.b16 %v749
  %v1175 = vunpack.c.h.b16 %v749
  %v1176 = vunpack.c.l.b16 %v750
  %v1177 = vunpack.c.h.b16 %v750
  %v1178 = vunpack.c.l.b16 %v751
  %v1179 = vunpack.c.h.b16 %v751
  %v1180 = vunpack.c.l.b16 %v752
  %v1181 = vunpack.c.h.b16 %v752
  %v1182 = vunpack.c.l.b16 %v753
  %v1183 = vunpack.c.h.b16 %v753
  %v1184 = vunpack.c.l.b16 %v754
  %v1185 = vunpack.c.h.b16 %v754
  %v1186 = vunpack.c.l.b16 %v755
  %v1187 = vunpack.c.h.b16 %v755
  %v1188 = vunpack.c.l.b16 %v756
  %v1189 = vunpack.c.h.b16 %v756
  %v1190 = vunpack.c.l.b16 %v757
  %v1191 = vunpack.c.h.b16 %v757
  %v1192 = vunpack.c.l.b16 %v758
  %v1193 = vunpack.c.h.b16 %v758
  %v1194 = vunpack.c.l.b16 %v759
  %v1195 = vunpack.c.h.b16 %v759
  %v1196 = vunpack.c.l.b16 %v760
  %v1197 = vunpack.c.h.b16 %v760
  %v1198 = vunpack.c.l.b16 %v761
  %v1199 = vunpack.c.h.b16 %v761
  %v1200 = vunpack.c.l.b16 %v762
  %v1201 = vunpack.c.h.b16 %v762
  %v1202 = vunpack.c.l.b16 %v763
  %v1203 = vunpack.c.h.b16 %v763
  %v1204 = vunpack.c.l.b16 %v764
  %v1205 = vunpack.c.h.b16 %v764
  %v1206 = vunpack.c.l.b16 %v765
  %v1207 = vunpack.c.h.b16 %v765
  %v1208 = vunpack.c.l.b16 %v766
  %v1209 = vunpack.c.h.b16 %v766
  %v1210 = vunpack.c.l.b16 %v767
  %v1211 = vunpack.c.h.b16 %v767
  %v1212 = vunpack.c.l.b16 %v768
  %v1213 = vunpack.c.h.b16 %v768
  %v1214 = vunpack.c.l.b16 %v769
  %v1215 = vunpack.c.h.b16 %v769
  %v1216 = vunpack.c.l.b16 %v770
  %v1217 = vunpack.c.h.b16 %v770
  %v1218 = vunpack.c.l.b16 %v771
  %v1219 = vunpack.c.h.b16 %v771
  %v1220 = vunpack.c.l.b16 %v772
  %v1221 = vunpack.c.h.b16 %v772
  %v1222 = vunpack.c.l.b16 %v773
  %v1223 = vunpack.c.h.b16 %v773
  %v1224 = vunpack.c.l.b16 %v774
  %v1225 = vunpack.c.h.b16 %v774
  %v1226 = vunpack.c.l.b16 %v775
  %v1227 = vunpack.c.h.b16 %v775
  %v1228 = vunpack.c.l.b16 %v776
  %v1229 = vunpack.c.h.b16 %v776
  %v1230 = vunpack.c.l.b16 %v777
  %v1231 = vunpack.c.h.b16 %v777
  %v1232 = vunpack.c.l.b16 %v778
  %v1233 = vunpack.c.h.b16 %v778
  %v1234 = vunpack.c.l.b16 %v779
  %v1235 = vunpack.c.h.b16 %v779
  %v1236 = vunpack.c.l.b16 %v780
  %v1237 = vunpack.c.h.b16 %v780
  %v1238 = vunpack.c.l.b16 %v781
  %v1239 = vunpack.c.h.b16 %v781
  %v1240 = vunpack.c.l.b16 %v782
  %v1241 = vunpack.c.h.b16 %v782
  %v1242 = vunpack.c.l.b16 %v783
  %v1243 = vunpack.c.h.b16 %v783
  %v1244 = vunpack.c.l.b16 %v784
  %v1245 = vunpack.c.h.b16 %v784
  %v1246 = vunpack.c.l.b16 %v785
  %v1247 = vunpack.c.h.b16 %v785
  %v1248 = vunpack.c.l.b16 %v786
  %v1249 = vunpack.c.h.b16 %v786
  %v1250 = vunpack.c.l.b16 %v787
  %v1251 = vunpack.c.h.b16 %v787
  %v1252 = vunpack.c.l.b16 %v788
  %v1253 = vunpack.c.h.b16 %v788
  %v1254 = vunpack.c.l.b16 %v789
  %v1255 = vunpack.c.h.b16 %v789
  %v1256 = vunpack.c.l.b16 %v790
  %v1257 = vunpack.c.h.b16 %v790
  %v1258 = vunpack.c.l.b16 %v791
  %v1259 = vunpack.c.h.b16 %v791
  %v1260 = vpack.c.b16 %v1020, %v1004
  %v1261 = vpack.c.b16 %v1021, %v1005
  %v1262 = vpack.c.b16 %v1022, %v1006
  %v1263 = vpack.c.b16 %v1023, %v1007
  %v1264 = vpack.c.b16 %v1024, %v1008
  %v1265 = vpack.c.b16 %v1025, %v1009
  %v1266 = vpack.c.b16 %v1026, %v1010
  %v1267 = vpack.c.b16 %v1027, %v1011
  %v1268 = vpack.c.b16 %v1028, %v1012
  %v1269 = vpack.c.b16 %v1029, %v1013
  %v1270 = vpack.c.b16 %v1030, %v1014
  %v1271 = vpack.c.b16 %v1031, %v1015
  %v1272 = vpack.c.b16 %v1032, %v1016
  %v1273 = vpack.c.b16 %v1033, %v1017
  %v1274 = vpack.c.b16 %v1034, %v1018
  %v1275 = vpack.c.b16 %v1035, %v1019
  %v1276 = vpack.c.b16 %v1052, %v1036
  %v1277 = vpack.c.b16 %v1053, %v1037
  %v1278 = vpack.c.b16 %v1054, %v1038
  %v1279 = vpack.c.b16 %v1055, %v1039
  %v1280 = vpack.c.b16 %v1056, %v1040
  %v1281 = vpack.c.b16 %v1057, %v1041
  %v1282 = vpack.c.b16 %v1058, %v1042
  %v1283 = vpack.c.b16 %v1059, %v1043
  %v1284 = vpack.c.b16 %v1060, %v1044
  %v1285 = vpack.c.b16 %v1061, %v1045
  %v1286 = vpack.c.b16 %v1062, %v1046
  %v1287 = vpack.c.b16 %v1063, %v1047
  %v1288 = vpack.c.b16 %v1064, %v1048
  %v1289 = vpack.c.b16 %v1065, %v1049
  %v1290 = vpack.c.b16 %v1066, %v1050
  %v1291 = vpack.c.b16 %v1067, %v1051
  %v1292 = vpack.c.b16 %v1084, %v1068
  %v1293 = vpack.c.b16 %v1085, %v1069
  %v1294 = vpack.c.b16 %v1086, %v1070
  %v1295 = vpack.c.b16 %v1087, %v1071
  %v1296 = vpack.c.b16 %v1088, %v1072
  %v1297 = vpack.c.b16 %v1089, %v1073
  %v1298 = vpack.c.b16 %v1090, %v1074
  %v1299 = vpack.c.b16 %v1091, %v1075
  %v1300 = vpack.c.b16 %v1092, %v1076
  %v1301 = vpack.c.b16 %v1093, %v1077
  %v1302 = vpack.c.b16 %v1094, %v1078
  %v1303 = vpack.c.b16 %v1095, %v1079
  %v1304 = vpack.c.b16 %v1096, %v1080
  %v1305 = vpack.c.b16 %v1097, %v1081
  %v1306 = vpack.c.b16 %v1098, %v1082
  %v1307 = vpack.c.b16 %v1099, %v1083
  %v1308 = vpack.c.b16 %v1116, %v1100
  %v1309 = vpack.c.b16 %v1117, %v1101
  %v1310 = vpack.c.b16 %v1118, %v1102
  %v1311 = vpack.c.b16 %v1119, %v1103
  %v1312 = vpack.c.b16 %v1120, %v1104
  %v1313 = vpack.c.b16 %v1121, %v1105
  %v1314 = vpack.c.b16 %v1122, %v1106
  %v1315 = vpack.c.b16 %v1123, %v1107
  %v1316 = vpack.c.b16 %v1124, %v1108
  %v1317 = vpack.c.b16 %v1125, %v1109
  %v1318 = vpack.c.b16 %v1126, %v1110
  %v1319 = vpack.c.b16 %v1127, %v1111
  %v1320 = vpack.c.b16 %v1128, %v1112
  %v1321 = vpack.c.b16 %v1129, %v1113
  %v1322 = vpack.c.b16 %v1130, %v1114
  %v1323 = vpack.c.b16 %v1131, %v1115
  %v1324 = vpack.c.b16 %v1148, %v1132
  %v1325 = vpack.c.b16 %v1149, %v1133
  %v1326 = vpack.c.b16 %v1150, %v1134
  %v1327 = vpack.c.b16 %v1151, %v1135
  %v1328 = vpack.c.b16 %v1152, %v1136
  %v1329 = vpack.c.b16 %v1153, %v1137
  %v1330 = vpack.c.b16 %v1154, %v1138
  %v1331 = vpack.c.b16 %v1155, %v1139
  %v1332 = vpack.c.b16 %v1156, %v1140
  %v1333 = vpack.c.b16 %v1157, %v1141
  %v1334 = vpack.c.b16 %v1158, %v1142
  %v1335 = vpack.c.b16 %v1159, %v1143
  %v1336 = vpack.c.b16 %v1160, %v1144
  %v1337 = vpack.c.b16 %v1161, %v1145
  %v1338 = vpack.c.b16 %v1162, %v1146
  %v1339 = vpack.c.b16 %v1163, %v1147
  %v1340 = vpack.c.b16 %v1180, %v1164
  %v1341 = vpack.c.b16 %v1181, %v1165
  %v1342 = vpack.c.b16 %v1182, %v1166
  %v1343 = vpack.c.b16 %v1183, %v1167
  %v1344 = vpack.c.b16 %v1184, %v1168
  %v1345 = vpack.c.b16 %v1185, %v1169
  %v1346 = vpack.c.b16 %v1186, %v1170
  %v1347 = vpack.c.b16 %v1187, %v1171
  %v1348 = vpack.c.b16 %v1188, %v1172
  %v1349 = vpack.c.b16 %v1189, %v1173
  %v1350 = vpack.c.b16 %v1190, %v1174
  %v1351 = vpack.c.b16 %v1191, %v1175
  %v1352 = vpack.c.b16 %v1192, %v1176
  %v1353 = vpack.c.b16 %v1193, %v1177
  %v1354 = vpack.c.b16 %v1194, %v1178
  %v1355 = vpack.c.b16 %v1195, %v1179
  %v1356 = vpack.c.b16 %v1212, %v1196
  %v1357 = vpack.c.b16 %v1213, %v1197
  %v1358 = vpack.c.b16 %v1214, %v1198
  %v1359 = vpack.c.b16 %v1215, %v1199
  %v1360 = vpack.c.b16 %v1216, %v1200
  %v1361 = vpack.c.b16 %v1217, %v1201
  %v1362 = vpack.c.b16 %v1218, %v1202
  %v1363 = vpack.c.b16 %v1219, %v1203
  %v1364 = vpack.c.b16 %v1220, %v1204
  %v1365 = vpack.c.b16 %v1221, %v1205
  %v1366 = vpack.c.b16 %v1222, %v1206
  %v1367 = vpack.c.b16 %v1223, %v1207
  %v1368 = vpack.c.b16 %v1224, %v1208
  %v1369 = vpack.c.b16 %v1225, %v1209
  %v1370 = vpack.c.b16 %v1226, %v1210
  %v1371 = vpack.c.b16 %v1227, %v1211
  %v1372 = vpack.c.b16 %v1244, %v1228
  %v1373 = vpack.c.b16 %v1245, %v1229
  %v1374 = vpack.c.b16 %v1246, %v1230
  %v1375 = vpack.c.b16 %v1247, %v1231
  %v1376 = vpack.c.b16 %v1248, %v1232
  %v1377 = vpack.c.b16 %v1249, %v1233
  %v1378 = vpack.c.b16 %v1250, %v1234
  %v1379 = vpack.c.b16 %v1251, %v1235
  %v1380 = vpack.c.b16 %v1252, %v1236
  %v1381 = vpack.c.b16 %v1253, %v1237
  %v1382 = vpack.c.b16 %v1254, %v1238
  %v1383 = vpack.c.b16 %v1255, %v1239
  %v1384 = vpack.c.b16 %v1256, %v1240
  %v1385 = vpack.c.b16 %v1257, %v1241
  %v1386 = vpack.c.b16 %v1258, %v1242
  %v1387 = vpack.c.b16 %v1259, %v1243
  %1516 = vmatprep.subr.bf16.mxu0 %v1261
  %1517 = vmatpush1.bf16.msra.mxu0 %v1260
  %1518 = vmatprep.subr.bf16.mxu0 %v1277
  %1519 = vmatpush1.bf16.msra.mxu0 %v1276
  %1520 = vmatprep.subr.bf16.mxu0 %v1293
  %1521 = vmatpush1.bf16.msra.mxu0 %v1292
  %1522 = vmatprep.subr.bf16.mxu0 %v1309
  %1523 = vmatpush1.bf16.msra.mxu0 %v1308
  %1524 = vmatprep.subr.bf16.mxu0 %v1325
  %1525 = vmatpush1.bf16.msra.mxu0 %v1324
  %1526 = vmatprep.subr.bf16.mxu0 %v1341
  %1527 = vmatpush1.bf16.msra.mxu0 %v1340
  %1528 = vmatprep.subr.bf16.mxu0 %v1357
  %1529 = vmatpush1.bf16.msra.mxu0 %v1356
  %1530 = vmatprep.subr.bf16.mxu0 %v1373
  %1531 = vmatpush1.bf16.msra.mxu0 %v1372
  %1532 = vmatprep.subr.bf16.mxu0 0
  %1533 = vmatpush1.bf16.msra.mxu0 0
  %1534 = vmatprep.subr.bf16.mxu0 0
  %1535 = vmatpush1.bf16.msra.mxu0 0
  %1536 = vmatprep.subr.bf16.mxu0 0
  %1537 = vmatpush1.bf16.msra.mxu0 0
  %1538 = vmatprep.subr.bf16.mxu0 0
  %1539 = vmatpush1.bf16.msra.mxu0 0
  %1540 = vmatprep.subr.bf16.mxu0 0
  %1541 = vmatpush1.bf16.msra.mxu0 0
  %1542 = vmatprep.subr.bf16.mxu0 0
  %1543 = vmatpush1.bf16.msra.mxu0 0
  %1544 = vmatprep.subr.bf16.mxu0 0
  %1545 = vmatpush1.bf16.msra.mxu0 0
  %1546 = vmatprep.subr.bf16.mxu0 0
  %1547 = vmatpush1.bf16.msra.mxu0 0
  %1548 = vmatprep.mubr.bf16.mxu0 0
  %1549 = vmatmul.mubr.bf16.gmra.mrb[0].mxu0 %v663
  %v1550 = vpop.f32.mrb[0].mxu0
  %v1551 = vadd.f32 %v799, %v1550
  %v1552 = vpop.f32.mrb[0].mxu0
  %v1553 = vadd.f32 %v803, %v1552
  %v1554 = vpop.f32.mrb[0].mxu0
  %v1555 = vpop.f32.mrb[0].mxu0
  %1556 = vdwg.mxu0
  %1557 = vmatprep.subr.bf16.mxu0 %v1263
  %1558 = vmatpush1.bf16.msra.mxu0 %v1262
  %1559 = vmatprep.subr.bf16.mxu0 %v1279
  %1560 = vmatpush1.bf16.msra.mxu0 %v1278
  %1561 = vmatprep.subr.bf16.mxu0 %v1295
  %1562 = vmatpush1.bf16.msra.mxu0 %v1294
  %1563 = vmatprep.subr.bf16.mxu0 %v1311
  %1564 = vmatpush1.bf16.msra.mxu0 %v1310
  %1565 = vmatprep.subr.bf16.mxu0 %v1327
  %1566 = vmatpush1.bf16.msra.mxu0 %v1326
  %1567 = vmatprep.subr.bf16.mxu0 %v1343
  %1568 = vmatpush1.bf16.msra.mxu0 %v1342
  %1569 = vmatprep.subr.bf16.mxu0 %v1359
  %1570 = vmatpush1.bf16.msra.mxu0 %v1358
  %1571 = vmatprep.subr.bf16.mxu0 %v1375
  %1572 = vmatpush1.bf16.msra.mxu0 %v1374
  %1573 = vmatprep.subr.bf16.mxu0 0
  %1574 = vmatpush1.bf16.msra.mxu0 0
  %1575 = vmatprep.subr.bf16.mxu0 0
  %1576 = vmatpush1.bf16.msra.mxu0 0
  %1577 = vmatprep.subr.bf16.mxu0 0
  %1578 = vmatpush1.bf16.msra.mxu0 0
  %1579 = vmatprep.subr.bf16.mxu0 0
  %1580 = vmatpush1.bf16.msra.mxu0 0
  %1581 = vmatprep.subr.bf16.mxu0 0
  %1582 = vmatpush1.bf16.msra.mxu0 0
  %1583 = vmatprep.subr.bf16.mxu0 0
  %1584 = vmatpush1.bf16.msra.mxu0 0
  %1585 = vmatprep.subr.bf16.mxu0 0
  %1586 = vmatpush1.bf16.msra.mxu0 0
  %1587 = vmatprep.subr.bf16.mxu0 0
  %1588 = vmatpush1.bf16.msra.mxu0 0
  %1589 = vmatprep.mubr.bf16.mxu0 0
  %1590 = vmatmul.mubr.bf16.gmra.mrb[0].mxu0 %v663
  %v1591 = vpop.f32.mrb[0].mxu0
  %v1592 = vadd.f32 %v807, %v1591
  %v1593 = vpop.f32.mrb[0].mxu0
  %v1594 = vadd.f32 %v811, %v1593
  %v1595 = vpop.f32.mrb[0].mxu0
  %v1596 = vpop.f32.mrb[0].mxu0
  %1597 = vdwg.mxu0
  %1598 = vmatprep.subr.bf16.mxu0 %v1265
  %1599 = vmatpush1.bf16.msra.mxu0 %v1264
  %1600 = vmatprep.subr.bf16.mxu0 %v1281
  %1601 = vmatpush1.bf16.msra.mxu0 %v1280
  %1602 = vmatprep.subr.bf16.mxu0 %v1297
  %1603 = vmatpush1.bf16.msra.mxu0 %v1296
  %1604 = vmatprep.subr.bf16.mxu0 %v1313
  %1605 = vmatpush1.bf16.msra.mxu0 %v1312
  %1606 = vmatprep.subr.bf16.mxu0 %v1329
  %1607 = vmatpush1.bf16.msra.mxu0 %v1328
  %1608 = vmatprep.subr.bf16.mxu0 %v1345
  %1609 = vmatpush1.bf16.msra.mxu0 %v1344
  %1610 = vmatprep.subr.bf16.mxu0 %v1361
  %1611 = vmatpush1.bf16.msra.mxu0 %v1360
  %1612 = vmatprep.subr.bf16.mxu0 %v1377
  %1613 = vmatpush1.bf16.msra.mxu0 %v1376
  %1614 = vmatprep.subr.bf16.mxu0 0
  %1615 = vmatpush1.bf16.msra.mxu0 0
  %1616 = vmatprep.subr.bf16.mxu0 0
  %1617 = vmatpush1.bf16.msra.mxu0 0
  %1618 = vmatprep.subr.bf16.mxu0 0
  %1619 = vmatpush1.bf16.msra.mxu0 0
  %1620 = vmatprep.subr.bf16.mxu0 0
  %1621 = vmatpush1.bf16.msra.mxu0 0
  %1622 = vmatprep.subr.bf16.mxu0 0
  %1623 = vmatpush1.bf16.msra.mxu0 0
  %1624 = vmatprep.subr.bf16.mxu0 0
  %1625 = vmatpush1.bf16.msra.mxu0 0
  %1626 = vmatprep.subr.bf16.mxu0 0
  %1627 = vmatpush1.bf16.msra.mxu0 0
  %1628 = vmatprep.subr.bf16.mxu0 0
  %1629 = vmatpush1.bf16.msra.mxu0 0
  %1630 = vmatprep.mubr.bf16.mxu0 0
  %1631 = vmatmul.mubr.bf16.gmra.mrb[0].mxu0 %v663
  %v1632 = vpop.f32.mrb[0].mxu0
  %v1633 = vadd.f32 %v815, %v1632
  %v1634 = vpop.f32.mrb[0].mxu0
  %v1635 = vadd.f32 %v819, %v1634
  %v1636 = vpop.f32.mrb[0].mxu0
  %v1637 = vpop.f32.mrb[0].mxu0
  %1638 = vdwg.mxu0
  %1639 = vmatprep.subr.bf16.mxu0 %v1267
  %1640 = vmatpush1.bf16.msra.mxu0 %v1266
  %1641 = vmatprep.subr.bf16.mxu0 %v1283
  %1642 = vmatpush1.bf16.msra.mxu0 %v1282
  %1643 = vmatprep.subr.bf16.mxu0 %v1299
  %1644 = vmatpush1.bf16.msra.mxu0 %v1298
  %1645 = vmatprep.subr.bf16.mxu0 %v1315
  %1646 = vmatpush1.bf16.msra.mxu0 %v1314
  %1647 = vmatprep.subr.bf16.mxu0 %v1331
  %1648 = vmatpush1.bf16.msra.mxu0 %v1330
  %1649 = vmatprep.subr.bf16.mxu0 %v1347
  %1650 = vmatpush1.bf16.msra.mxu0 %v1346
  %1651 = vmatprep.subr.bf16.mxu0 %v1363
  %1652 = vmatpush1.bf16.msra.mxu0 %v1362
  %1653 = vmatprep.subr.bf16.mxu0 %v1379
  %1654 = vmatpush1.bf16.msra.mxu0 %v1378
  %1655 = vmatprep.subr.bf16.mxu0 0
  %1656 = vmatpush1.bf16.msra.mxu0 0
  %1657 = vmatprep.subr.bf16.mxu0 0
  %1658 = vmatpush1.bf16.msra.mxu0 0
  %1659 = vmatprep.subr.bf16.mxu0 0
  %1660 = vmatpush1.bf16.msra.mxu0 0
  %1661 = vmatprep.subr.bf16.mxu0 0
  %1662 = vmatpush1.bf16.msra.mxu0 0
  %1663 = vmatprep.subr.bf16.mxu0 0
  %1664 = vmatpush1.bf16.msra.mxu0 0
  %1665 = vmatprep.subr.bf16.mxu0 0
  %1666 = vmatpush1.bf16.msra.mxu0 0
  %1667 = vmatprep.subr.bf16.mxu0 0
  %1668 = vmatpush1.bf16.msra.mxu0 0
  %1669 = vmatprep.subr.bf16.mxu0 0
  %1670 = vmatpush1.bf16.msra.mxu0 0
  %1671 = vmatprep.mubr.bf16.mxu0 0
  %1672 = vmatmul.mubr.bf16.gmra.mrb[0].mxu0 %v663
  %v1673 = vpop.f32.mrb[0].mxu0
  %v1674 = vadd.f32 %v823, %v1673
  %v1675 = vpop.f32.mrb[0].mxu0
  %v1676 = vadd.f32 %v827, %v1675
  %v1677 = vpop.f32.mrb[0].mxu0
  %v1678 = vpop.f32.mrb[0].mxu0
  %1679 = vdwg.mxu0
  %1680 = vmatprep.subr.bf16.mxu0 %v1269
  %1681 = vmatpush1.bf16.msra.mxu0 %v1268
  %1682 = vmatprep.subr.bf16.mxu0 %v1285
  %1683 = vmatpush1.bf16.msra.mxu0 %v1284
  %1684 = vmatprep.subr.bf16.mxu0 %v1301
  %1685 = vmatpush1.bf16.msra.mxu0 %v1300
  %1686 = vmatprep.subr.bf16.mxu0 %v1317
  %1687 = vmatpush1.bf16.msra.mxu0 %v1316
  %1688 = vmatprep.subr.bf16.mxu0 %v1333
  %1689 = vmatpush1.bf16.msra.mxu0 %v1332
  %1690 = vmatprep.subr.bf16.mxu0 %v1349
  %1691 = vmatpush1.bf16.msra.mxu0 %v1348
  %1692 = vmatprep.subr.bf16.mxu0 %v1365
  %1693 = vmatpush1.bf16.msra.mxu0 %v1364
  %1694 = vmatprep.subr.bf16.mxu0 %v1381
  %1695 = vmatpush1.bf16.msra.mxu0 %v1380
  %1696 = vmatprep.subr.bf16.mxu0 0
  %1697 = vmatpush1.bf16.msra.mxu0 0
  %1698 = vmatprep.subr.bf16.mxu0 0
  %1699 = vmatpush1.bf16.msra.mxu0 0
  %1700 = vmatprep.subr.bf16.mxu0 0
  %1701 = vmatpush1.bf16.msra.mxu0 0
  %1702 = vmatprep.subr.bf16.mxu0 0
  %1703 = vmatpush1.bf16.msra.mxu0 0
  %1704 = vmatprep.subr.bf16.mxu0 0
  %1705 = vmatpush1.bf16.msra.mxu0 0
  %1706 = vmatprep.subr.bf16.mxu0 0
  %1707 = vmatpush1.bf16.msra.mxu0 0
  %1708 = vmatprep.subr.bf16.mxu0 0
  %1709 = vmatpush1.bf16.msra.mxu0 0
  %1710 = vmatprep.subr.bf16.mxu0 0
  %1711 = vmatpush1.bf16.msra.mxu0 0
  %1712 = vmatprep.mubr.bf16.mxu0 0
  %1713 = vmatmul.mubr.bf16.gmra.mrb[0].mxu0 %v663
  %v1714 = vpop.f32.mrb[0].mxu0
  %v1715 = vadd.f32 %v831, %v1714
  %v1716 = vpop.f32.mrb[0].mxu0
  %v1717 = vadd.f32 %v835, %v1716
  %v1718 = vpop.f32.mrb[0].mxu0
  %v1719 = vpop.f32.mrb[0].mxu0
  %1720 = vdwg.mxu0
  %1721 = vmatprep.subr.bf16.mxu0 %v1271
  %1722 = vmatpush1.bf16.msra.mxu0 %v1270
  %1723 = vmatprep.subr.bf16.mxu0 %v1287
  %1724 = vmatpush1.bf16.msra.mxu0 %v1286
  %1725 = vmatprep.subr.bf16.mxu0 %v1303
  %1726 = vmatpush1.bf16.msra.mxu0 %v1302
  %1727 = vmatprep.subr.bf16.mxu0 %v1319
  %1728 = vmatpush1.bf16.msra.mxu0 %v1318
  %1729 = vmatprep.subr.bf16.mxu0 %v1335
  %1730 = vmatpush1.bf16.msra.mxu0 %v1334
  %1731 = vmatprep.subr.bf16.mxu0 %v1351
  %1732 = vmatpush1.bf16.msra.mxu0 %v1350
  %1733 = vmatprep.subr.bf16.mxu0 %v1367
  %1734 = vmatpush1.bf16.msra.mxu0 %v1366
  %1735 = vmatprep.subr.bf16.mxu0 %v1383
  %1736 = vmatpush1.bf16.msra.mxu0 %v1382
  %1737 = vmatprep.subr.bf16.mxu0 0
  %1738 = vmatpush1.bf16.msra.mxu0 0
  %1739 = vmatprep.subr.bf16.mxu0 0
  %1740 = vmatpush1.bf16.msra.mxu0 0
  %1741 = vmatprep.subr.bf16.mxu0 0
  %1742 = vmatpush1.bf16.msra.mxu0 0
  %1743 = vmatprep.subr.bf16.mxu0 0
  %1744 = vmatpush1.bf16.msra.mxu0 0
  %1745 = vmatprep.subr.bf16.mxu0 0
  %1746 = vmatpush1.bf16.msra.mxu0 0
  %1747 = vmatprep.subr.bf16.mxu0 0
  %1748 = vmatpush1.bf16.msra.mxu0 0
  %1749 = vmatprep.subr.bf16.mxu0 0
  %1750 = vmatpush1.bf16.msra.mxu0 0
  %1751 = vmatprep.subr.bf16.mxu0 0
  %1752 = vmatpush1.bf16.msra.mxu0 0
  %1753 = vmatprep.mubr.bf16.mxu0 0
  %1754 = vmatmul.mubr.bf16.gmra.mrb[0].mxu0 %v663
  %v1755 = vpop.f32.mrb[0].mxu0
  %v1756 = vadd.f32 %v839, %v1755
  %v1757 = vpop.f32.mrb[0].mxu0
  %v1758 = vadd.f32 %v843, %v1757
  %v1759 = vpop.f32.mrb[0].mxu0
  %v1760 = vpop.f32.mrb[0].mxu0
  %1761 = vdwg.mxu0
  %1762 = vmatprep.subr.bf16.mxu0 %v1273
  %1763 = vmatpush1.bf16.msra.mxu0 %v1272
  %1764 = vmatprep.subr.bf16.mxu0 %v1289
  %1765 = vmatpush1.bf16.msra.mxu0 %v1288
  %1766 = vmatprep.subr.bf16.mxu0 %v1305
  %1767 = vmatpush1.bf16.msra.mxu0 %v1304
  %1768 = vmatprep.subr.bf16.mxu0 %v1321
  %1769 = vmatpush1.bf16.msra.mxu0 %v1320
  %1770 = vmatprep.subr.bf16.mxu0 %v1337
  %1771 = vmatpush1.bf16.msra.mxu0 %v1336
  %1772 = vmatprep.subr.bf16.mxu0 %v1353
  %1773 = vmatpush1.bf16.msra.mxu0 %v1352
  %1774 = vmatprep.subr.bf16.mxu0 %v1369
  %1775 = vmatpush1.bf16.msra.mxu0 %v1368
  %1776 = vmatprep.subr.bf16.mxu0 %v1385
  %1777 = vmatpush1.bf16.msra.mxu0 %v1384
  %1778 = vmatprep.subr.bf16.mxu0 0
  %1779 = vmatpush1.bf16.msra.mxu0 0
  %1780 = vmatprep.subr.bf16.mxu0 0
  %1781 = vmatpush1.bf16.msra.mxu0 0
  %1782 = vmatprep.subr.bf16.mxu0 0
  %1783 = vmatpush1.bf16.msra.mxu0 0
  %1784 = vmatprep.subr.bf16.mxu0 0
  %1785 = vmatpush1.bf16.msra.mxu0 0
  %1786 = vmatprep.subr.bf16.mxu0 0
  %1787 = vmatpush1.bf16.msra.mxu0 0
  %1788 = vmatprep.subr.bf16.mxu0 0
  %1789 = vmatpush1.bf16.msra.mxu0 0
  %1790 = vmatprep.subr.bf16.mxu0 0
  %1791 = vmatpush1.bf16.msra.mxu0 0
  %1792 = vmatprep.subr.bf16.mxu0 0
  %1793 = vmatpush1.bf16.msra.mxu0 0
  %1794 = vmatprep.mubr.bf16.mxu0 0
  %1795 = vmatmul.mubr.bf16.gmra.mrb[0].mxu0 %v663
  %v1796 = vpop.f32.mrb[0].mxu0
  %v1797 = vadd.f32 %v847, %v1796
  %v1798 = vpop.f32.mrb[0].mxu0
  %v1799 = vadd.f32 %v851, %v1798
  %v1800 = vpop.f32.mrb[0].mxu0
  %v1801 = vpop.f32.mrb[0].mxu0
  %1802 = vdwg.mxu0
  %1803 = vmatprep.subr.bf16.mxu0 %v1275
  %1804 = vmatpush1.bf16.msra.mxu0 %v1274
  %1805 = vmatprep.subr.bf16.mxu0 %v1291
  %1806 = vmatpush1.bf16.msra.mxu0 %v1290
  %1807 = vmatprep.subr.bf16.mxu0 %v1307
  %1808 = vmatpush1.bf16.msra.mxu0 %v1306
  %1809 = vmatprep.subr.bf16.mxu0 %v1323
  %1810 = vmatpush1.bf16.msra.mxu0 %v1322
  %1811 = vmatprep.subr.bf16.mxu0 %v1339
  %1812 = vmatpush1.bf16.msra.mxu0 %v1338
  %1813 = vmatprep.subr.bf16.mxu0 %v1355
  %1814 = vmatpush1.bf16.msra.mxu0 %v1354
  %1815 = vmatprep.subr.bf16.mxu0 %v1371
  %1816 = vmatpush1.bf16.msra.mxu0 %v1370
  %1817 = vmatprep.subr.bf16.mxu0 %v1387
  %1818 = vmatpush1.bf16.msra.mxu0 %v1386
  %1819 = vmatprep.subr.bf16.mxu0 0
  %1820 = vmatpush1.bf16.msra.mxu0 0
  %1821 = vmatprep.subr.bf16.mxu0 0
  %1822 = vmatpush1.bf16.msra.mxu0 0
  %1823 = vmatprep.subr.bf16.mxu0 0
  %1824 = vmatpush1.bf16.msra.mxu0 0
  %1825 = vmatprep.subr.bf16.mxu0 0
  %1826 = vmatpush1.bf16.msra.mxu0 0
  %1827 = vmatprep.subr.bf16.mxu0 0
  %1828 = vmatpush1.bf16.msra.mxu0 0
  %1829 = vmatprep.subr.bf16.mxu0 0
  %1830 = vmatpush1.bf16.msra.mxu0 0
  %1831 = vmatprep.subr.bf16.mxu0 0
  %1832 = vmatpush1.bf16.msra.mxu0 0
  %1833 = vmatprep.subr.bf16.mxu0 0
  %1834 = vmatpush1.bf16.msra.mxu0 0
  %1835 = vmatprep.mubr.bf16.mxu0 0
  %1836 = vmatmul.mubr.bf16.gmra.mrb[0].mxu0 %v663
  %v1837 = vpop.f32.mrb[0].mxu0
  %v1838 = vadd.f32 %v855, %v1837
  %v1839 = vpop.f32.mrb[0].mxu0
  %v1840 = vadd.f32 %v859, %v1839
  %v1841 = vpop.f32.mrb[0].mxu0
  %v1842 = vpop.f32.mrb[0].mxu0
  %1843 = vdwg.mxu0
  %v1860 = vcombine.low %v1551, %v1553
  %v1861 = vcombine.low %v1592, %v1594
  %v1863 = vunpack.c.l.s4 1983009808
  %v1864 = vunpack.c.0.s8 %v1863
  %v1865 = vlaneseq
  %v1866 = vshrl.u32 %v1865, 7
  %v1867 = vsub.s32 %v1864, %v1866
  %v1868 = vrot.slane %v1860, %v1867
  %v1870 = vunpack.c.l.s4 1983009808
  %v1871 = vunpack.c.0.s8 %v1870
  %v1872 = vlaneseq
  %v1873 = vshrl.u32 %v1872, 7
  %v1874 = vsub.s32 %v1871, %v1873
  %v1875 = vrot.slane %v1861, %v1874
  %v1876 = vcombine.low %v1868, %v1875
  %v1877 = vcombine.low %v1633, %v1635
  %v1878 = vcombine.low %v1674, %v1676
  %v1880 = vunpack.c.l.s4 1983009808
  %v1881 = vunpack.c.0.s8 %v1880
  %v1882 = vlaneseq
  %v1883 = vshrl.u32 %v1882, 7
  %v1884 = vsub.s32 %v1881, %v1883
  %v1885 = vrot.slane %v1877, %v1884
  %v1887 = vunpack.c.l.s4 1983009808
  %v1888 = vunpack.c.0.s8 %v1887
  %v1889 = vlaneseq
  %v1890 = vshrl.u32 %v1889, 7
  %v1891 = vsub.s32 %v1888, %v1890
  %v1892 = vrot.slane %v1878, %v1891
  %v1893 = vcombine.low %v1885, %v1892
  %v1894 = vcombine.low %v1715, %v1717
  %v1895 = vcombine.low %v1756, %v1758
  %v1897 = vunpack.c.l.s4 1983009808
  %v1898 = vunpack.c.0.s8 %v1897
  %v1899 = vlaneseq
  %v1900 = vshrl.u32 %v1899, 7
  %v1901 = vsub.s32 %v1898, %v1900
  %v1902 = vrot.slane %v1894, %v1901
  %v1904 = vunpack.c.l.s4 1983009808
  %v1905 = vunpack.c.0.s8 %v1904
  %v1906 = vlaneseq
  %v1907 = vshrl.u32 %v1906, 7
  %v1908 = vsub.s32 %v1905, %v1907
  %v1909 = vrot.slane %v1895, %v1908
  %v1910 = vcombine.low %v1902, %v1909
  %v1911 = vcombine.low %v1797, %v1799
  %v1912 = vcombine.low %v1838, %v1840
  %v1914 = vunpack.c.l.s4 1983009808
  %v1915 = vunpack.c.0.s8 %v1914
  %v1916 = vlaneseq
  %v1917 = vshrl.u32 %v1916, 7
  %v1918 = vsub.s32 %v1915, %v1917
  %v1919 = vrot.slane %v1911, %v1918
  %v1921 = vunpack.c.l.s4 1983009808
  %v1922 = vunpack.c.0.s8 %v1921
  %v1923 = vlaneseq
  %v1924 = vshrl.u32 %v1923, 7
  %v1925 = vsub.s32 %v1922, %v1924
  %v1926 = vrot.slane %v1912, %v1925
  %v1927 = vcombine.low %v1919, %v1926
  %1932 = vst [vmem:[%s6] sm:$0xff] %v1876
  %1933 = vst [vmem:[%s6 + $0x8] sm:$0xff] %v1893
  %1934 = vst [vmem:[%s6 + $0x10] sm:$0xff] %v1910
  %1935 = vst [vmem:[%s6 + $0x18] sm:$0xff] %v1927
  // Predicated region
  $region26: #{forward.1} parent=0 // pred_check
    _
  $region27: #{forward.1} parent=0 // pred_check_branch
    %1937 = sbr.rel (0) target = $region29
  $region28: #{forward.1} parent=0 // pred_region
    _
  $region29: #{forward.1} parent=0 // pred_fallthru
    _
  // Predicated region
  $region30: #{forward.1} parent=0 // pred_check
    _
  $region31: #{forward.1} parent=0 // pred_check_branch
    %1939 = sbr.rel (0) target = $region33
  $region32: #{forward.1} parent=0 // pred_region
    _
  $region33: #{forward.1} parent=0 // pred_fallthru
    _

</llo_original>
